<compile_context>
chip_gen: v7x
topology: tpu7x:2x2x1
jax: 0.10.0
libtpu: 0.0.40
codegen_flags: <defaults>
</compile_context>

<pallas_src>
import functools

import jax
import jax.numpy as jnp
from jax.experimental import pallas as pl
from jax.experimental.pallas import tpu as pltpu

C1, C2, CH = 32, 64, 32     # hidden widths of the placeholder sub-modules
LANES = 128                 # packed lane width for every fused layer

# Row offsets of each fused layer inside the packed weight slab (all 8-aligned).
_R1 = 0                # layer 1 : rows 0:3 used (K=3), padded to 8 rows
_R2 = 8                # layer 2 : (128,128) block-diag gv_w2 / t_w2
_R3 = _R2 + LANES      # layer 3 : (128,128) [rg_w1 | rr_w1 | gv_wl]
_R4 = _R3 + LANES      # layer 4 : (128,128) block-diag rg_w2 / rr_w2 + eye(3)
_RT3 = _R4 + LANES     # trans FC1: t_w3 on pooled lanes 64:128
_RT4 = _RT3 + LANES    # trans FC2: t_w4
_WROWS = _RT4 + LANES  # 648 total rows


def _posenet_kernel(points_ref, mean_ref, w_ref, b_ref,
                    out_ref, predT_ref, gmax_ref):
    n = pl.program_id(1)

    pts = points_ref[0]                       # (TN, 3)
    mean = mean_ref[0]                        # (1, 3)
    centered = pts - mean                     # points - points.mean(dim=1, keepdim=True)

    dot = functools.partial(jnp.dot, preferred_element_type=jnp.float32)
    relu = lambda x: jnp.maximum(x, 0.0)

    # Fused layer 1: centered -> [h | th] in lanes 0:64       (TN, 128)
    z1 = relu(dot(centered, w_ref[_R1:_R1 + 3, :]) + b_ref[0:1, :])
    # Fused layer 2 (block-diag): [h | th] -> [feat | th2]     (TN, 128)
    z2 = relu(dot(z1, w_ref[_R2:_R3, :]) + b_ref[1:2, :])
    # Fused heads layer 3 on feat: [rg_pre | rr_pre | vote_line | 0]
    z3 = dot(z2, w_ref[_R3:_R4, :]) + b_ref[2:3, :]
    # Selective ReLU: lanes 0:64 are the rot hidden layers, lanes 64:67 pass
    # vote_line through untouched.
    lane = jax.lax.broadcasted_iota(jnp.int32, z3.shape, 1)
    act3 = jnp.where(lane < 2 * CH, relu(z3), z3)
    # Fused layer 4: -> merged [vote_line | vp1 | vp2] in lanes 0:9
    z4 = dot(act3, w_ref[_R4:_RT3, :]) + b_ref[3:4, :]
    out_ref[0] = z4[:, 0:9]

    # ---- Pose_T: running max-pool over all N tiles (lanes 64:128 hold th2) ----
    @pl.when(n == 0)
    def _init():
        gmax_ref[...] = jnp.full((1, LANES), -jnp.inf, dtype=jnp.float32)

    gmax_ref[...] = jnp.maximum(gmax_ref[...],
                                jnp.max(z2, axis=0, keepdims=True))

    @pl.when(n == pl.num_programs(1) - 1)
    def _finalize():
        g = gmax_ref[...]                                           # (1, 128)
        hid = relu(dot(g, w_ref[_RT3:_RT4, :]) + b_ref[4:5, :])     # (1, 128)
        T = dot(hid, w_ref[_RT4:_WROWS, :]) + b_ref[5:6, :]         # (1, 128)
        predT_ref[0] = T[:, 0:3] + mean                             # Pred_T = T + mean


def init_params(key):
    """Deterministic synthetic parameter init (same layout as before)."""
    shapes = [
        # GeoVote
        (3, C1), (1, C1), (C1, C2), (1, C2), (C2, 3), (1, 3),
        # Rot_green
        (C2, CH), (1, CH), (CH, 3), (1, 3),
        # Rot_red
        (C2, CH), (1, CH), (CH, 3), (1, 3),
        # Pose_T_v2
        (3, C1), (1, C1), (C1, C2), (1, C2), (C2, CH), (1, CH), (CH, 3), (1, 3),
    ]
    keys = jax.random.split(key, len(shapes))
    return [0.1 * jax.random.normal(k, s, dtype=jnp.float32)
            for k, s in zip(keys, shapes)]


def pack_params(params):
    """Pack the 22 raw parameters into one weight slab and one bias slab."""
    (gv_w1, gv_b1, gv_w2, gv_b2, gv_wl, gv_bl,
     rg_w1, rg_b1, rg_w2, rg_b2,
     rr_w1, rr_b1, rr_w2, rr_b2,
     t_w1, t_b1, t_w2, t_b2, t_w3, t_b3, t_w4, t_b4) = params

    w = jnp.zeros((_WROWS, LANES), jnp.float32)
    b = jnp.zeros((8, LANES), jnp.float32)

    # Layer 1: centered(.,3) -> [h | th] in lanes 0:64.
    w = w.at[_R1:_R1 + 3, 0:C1].set(gv_w1)
    w = w.at[_R1:_R1 + 3, C1:2 * C1].set(t_w1)
    b = b.at[0, 0:C1].set(gv_b1[0])
    b = b.at[0, C1:2 * C1].set(t_b1[0])

    # Layer 2 (block-diag): [h | th] -> [feat | th2].
    w = w.at[_R2:_R2 + C1, 0:C2].set(gv_w2)
    w = w.at[_R2 + C1:_R2 + 2 * C1, C2:2 * C2].set(t_w2)
    b = b.at[1, 0:C2].set(gv_b2[0])
    b = b.at[1, C2:2 * C2].set(t_b2[0])

    # Layer 3: feat (input lanes 0:64) -> [rg_pre | rr_pre | vote_line].
    w = w.at[_R3:_R3 + C2, 0:CH].set(rg_w1)
    w = w.at[_R3:_R3 + C2, CH:2 * CH].set(rr_w1)
    w = w.at[_R3:_R3 + C2, 2 * CH:2 * CH + 3].set(gv_wl)
    b = b.at[2, 0:CH].set(rg_b1[0])
    b = b.at[2, CH:2 * CH].set(rr_b1[0])
    b = b.at[2, 2 * CH:2 * CH + 3].set(gv_bl[0])

    # Layer 4: [rg | rr | vote_line] -> merged [vote_line | vp1 | vp2].
    w = w.at[_R4:_R4 + CH, 3:6].set(rg_w2)
    w = w.at[_R4 + CH:_R4 + 2 * CH, 6:9].set(rr_w2)
    w = w.at[_R4 + 2 * CH:_R4 + 2 * CH + 3, 0:3].set(jnp.eye(3, dtype=jnp.float32))
    b = b.at[3, 3:6].set(rg_b2[0])
    b = b.at[3, 6:9].set(rr_b2[0])

    # Trans FC1: pooled th2 (input lanes 64:128) -> lanes 0:32.
    w = w.at[_RT3 + C2:_RT3 + 2 * C2, 0:CH].set(t_w3)
    b = b.at[4, 0:CH].set(t_b3[0])

    # Trans FC2: lanes 0:32 -> T in lanes 0:3.
    w = w.at[_RT4:_RT4 + CH, 0:3].set(t_w4)
    b = b.at[5, 0:3].set(t_b4[0])

    return w, b


def posenet_forward(points, params, sym_type=2, tile_n=None):
    B, N, _ = points.shape

    if tile_n is None:
        tile_n = N
        for cand in (2048, 1024, 512, 256, 128):
            if N % cand == 0:
                tile_n = cand
                break
    assert N % tile_n == 0, "tile_n must divide N"
    num_n = N // tile_n

    w_slab, b_slab = pack_params(params)                      # packed once, in wrapper
    mean = jnp.mean(points, axis=1, keepdims=True)            # (B, 1, 3), precomputed

    merged, pred_t = pl.pallas_call(
        _posenet_kernel,
        grid=(B, num_n),
        in_specs=[
            pl.BlockSpec((1, tile_n, 3), lambda b, n: (b, n, 0)),   # points tile
            pl.BlockSpec((1, 1, 3), lambda b, n: (b, 0, 0)),        # per-batch mean
            pl.BlockSpec((_WROWS, LANES), lambda b, n: (0, 0)),     # weight slab
            pl.BlockSpec((8, LANES), lambda b, n: (0, 0)),          # bias slab
        ],
        out_specs=(
            pl.BlockSpec((1, tile_n, 9), lambda b, n: (b, n, 0)),   # merged votes
            pl.BlockSpec((1, 1, 3), lambda b, n: (b, 0, 0)),        # Pred_T
        ),
        out_shape=(
            jax.ShapeDtypeStruct((B, N, 9), jnp.float32),
            jax.ShapeDtypeStruct((B, 1, 3), jnp.float32),
        ),
        scratch_shapes=[pltpu.VMEM((1, LANES), jnp.float32)],       # running max-pool
        compiler_params=pltpu.CompilerParams(
            dimension_semantics=("parallel", "arbitrary")),
    )(points, mean, w_slab, b_slab)

    vote_line = merged[:, :, 0:3]
    vote_point1 = merged[:, :, 3:6]
    vote_point2 = merged[:, :, 6:9]
    pred_t = pred_t.reshape(B, 3)

    if sym_type == 2:
        return vote_line, vote_point1, vote_point2, pred_t
    return vote_line, vote_point1, None, pred_t


def posenet_reference(points, params):
    """Pure-JAX (unfused) reference of the same placeholder architecture."""
    (gv_w1, gv_b1, gv_w2, gv_b2, gv_wl, gv_bl,
     rg_w1, rg_b1, rg_w2, rg_b2,
     rr_w1, rr_b1, rr_w2, rr_b2,
     t_w1, t_b1, t_w2, t_b2, t_w3, t_b3, t_w4, t_b4) = params

    relu = lambda x: jnp.maximum(x, 0.0)
    mean = points.mean(axis=1, keepdims=True)
    c = points - mean

    h = relu(c @ gv_w1 + gv_b1)
    feat = relu(h @ gv_w2 + gv_b2)
    vote_line = feat @ gv_wl + gv_bl
    rg = relu(feat @ rg_w1 + rg_b1)
    vp1 = rg @ rg_w2 + rg_b2
    rr = relu(feat @ rr_w1 + rr_b1)
    vp2 = rr @ rr_w2 + rr_b2

    th = relu(c @ t_w1 + t_b1)
    th = relu(th @ t_w2 + t_b2)
    g = th.max(axis=1)
    g = relu(g @ t_w3 + t_b3)
    T = g @ t_w4 + t_b4
    pred_t = T + mean[:, 0, :]
    return vote_line, vp1, vp2, pred_t


if __name__ == "__main__":
    key = jax.random.PRNGKey(0)
    k_pts, k_params = jax.random.split(key)

    B, N = 2, 256
    points = jax.random.normal(k_pts, (B, N, 3), dtype=jnp.float32)
    params = init_params(k_params)

    # tile_n=128 -> grid (B, 2): exercises the cross-tile max-pool accumulator.
    outs = posenet_forward(points, params, sym_type=2, tile_n=128)
    outs = jax.block_until_ready(outs)
    vote_line, vp1, vp2, pred_t = outs

    assert vote_line.shape == (B, N, 3)
    assert vp1.shape == (B, N, 3)
    assert vp2.shape == (B, N, 3)
    assert pred_t.shape == (B, 3)

    ref = posenet_reference(points, params)
    for name, got, want in zip(("vote_line", "vote_point1", "vote_point2", "Pred_T"),
                               (vote_line, vp1, vp2, pred_t), ref):
        assert jnp.allclose(got, want, rtol=5e-2, atol=5e-3), name

    print("KERNEL_OK")
</pallas_src>

<mosaic_0001>
module attributes {stable_mosaic.version = 11 : i64} {
  func.func @_posenet_kernel(%arg0: i32, %arg1: i32, %arg2: memref<1x128x3xf32, #tpu.memory_space<vmem>>, %arg3: memref<1x1x3xf32, #tpu.memory_space<vmem>>, %arg4: memref<648x128xf32, #tpu.memory_space<vmem>>, %arg5: memref<8x128xf32, #tpu.memory_space<vmem>>, %arg6: memref<1x128x9xf32, #tpu.memory_space<vmem>>, %arg7: memref<1x1x3xf32, #tpu.memory_space<vmem>>, %arg8: memref<1x128xf32, #tpu.memory_space<vmem>>) attributes {dimension_semantics = [#tpu.dimension_semantics<parallel>, #tpu.dimension_semantics<arbitrary>], iteration_bounds = array<i64: 2, 2>, scalar_prefetch = 0 : i64, scratch_operands = 1 : i64, tpu.core_type = #tpu.core_type<tc>, window_params = [{transform_indices = @transform_0, window_bounds = array<i64: 1, 128, 3>}, {transform_indices = @transform_1, window_bounds = array<i64: 1, 1, 3>}, {pipeline_mode = #tpu.pipeline_mode<synchronous>, transform_indices = @transform_2, window_bounds = array<i64: 648, 128>}, {pipeline_mode = #tpu.pipeline_mode<synchronous>, transform_indices = @transform_3, window_bounds = array<i64: 8, 128>}, {transform_indices = @transform_4, window_bounds = array<i64: 1, 128, 9>}, {transform_indices = @transform_5, window_bounds = array<i64: 1, 1, 3>}]} {
    %c0 = arith.constant 0 : index
    %c0_0 = arith.constant 0 : index
    %c0_1 = arith.constant 0 : index
    %0 = vector.load %arg2[%c0, %c0_0, %c0_1] : memref<1x128x3xf32, #tpu.memory_space<vmem>>, vector<1x128x3xf32>
    %1 = vector.shape_cast %0 : vector<1x128x3xf32> to vector<128x3xf32>
    %c0_2 = arith.constant 0 : index
    %c0_3 = arith.constant 0 : index
    %c0_4 = arith.constant 0 : index
    %2 = vector.load %arg3[%c0_2, %c0_3, %c0_4] : memref<1x1x3xf32, #tpu.memory_space<vmem>>, vector<1x1x3xf32>
    %3 = vector.shape_cast %2 : vector<1x1x3xf32> to vector<1x3xf32>
    %4 = vector.broadcast %3 : vector<1x3xf32> to vector<128x3xf32>
    %5 = arith.subf %1, %4 : vector<128x3xf32>
    %c0_5 = arith.constant 0 : index
    %c0_6 = arith.constant 0 : index
    %6 = vector.load %arg4[%c0_5, %c0_6] : memref<648x128xf32, #tpu.memory_space<vmem>>, vector<3x128xf32>
    %cst = arith.constant dense<0.000000e+00> : vector<128x128xf32>
    %7 = tpu.matmul %5, %6, %cst {dimension_numbers = #tpu.dot_dimension_numbers<[1], [0], [0], [1], [0, 0, 1, 1], [], []>} : vector<128x3xf32>, vector<3x128xf32>, vector<128x128xf32> -> vector<128x128xf32>
    %c0_7 = arith.constant 0 : index
    %c0_8 = arith.constant 0 : index
    %8 = vector.load %arg5[%c0_7, %c0_8] : memref<8x128xf32, #tpu.memory_space<vmem>>, vector<1x128xf32>
    %9 = vector.broadcast %8 : vector<1x128xf32> to vector<128x128xf32>
    %10 = arith.addf %7, %9 : vector<128x128xf32>
    %cst_9 = arith.constant 0.000000e+00 : f32
    %11 = vector.broadcast %cst_9 : f32 to vector<128x128xf32>
    %12 = arith.maximumf %10, %11 : vector<128x128xf32>
    %c8 = arith.constant 8 : index
    %c0_10 = arith.constant 0 : index
    %13 = vector.load %arg4[%c8, %c0_10] : memref<648x128xf32, #tpu.memory_space<vmem>>, vector<128x128xf32>
    %cst_11 = arith.constant dense<0.000000e+00> : vector<128x128xf32>
    %14 = tpu.matmul %12, %13, %cst_11 {dimension_numbers = #tpu.dot_dimension_numbers<[1], [0], [0], [1], [0, 0, 1, 1], [], []>} : vector<128x128xf32>, vector<128x128xf32>, vector<128x128xf32> -> vector<128x128xf32>
    %c1 = arith.constant 1 : index
    %c0_12 = arith.constant 0 : index
    %15 = vector.load %arg5[%c1, %c0_12] : memref<8x128xf32, #tpu.memory_space<vmem>>, vector<1x128xf32>
    %16 = vector.broadcast %15 : vector<1x128xf32> to vector<128x128xf32>
    %17 = arith.addf %14, %16 : vector<128x128xf32>
    %cst_13 = arith.constant 0.000000e+00 : f32
    %18 = vector.broadcast %cst_13 : f32 to vector<128x128xf32>
    %19 = arith.maximumf %17, %18 : vector<128x128xf32>
    %c136 = arith.constant 136 : index
    %c0_14 = arith.constant 0 : index
    %20 = vector.load %arg4[%c136, %c0_14] : memref<648x128xf32, #tpu.memory_space<vmem>>, vector<128x128xf32>
    %cst_15 = arith.constant dense<0.000000e+00> : vector<128x128xf32>
    %21 = tpu.matmul %19, %20, %cst_15 {dimension_numbers = #tpu.dot_dimension_numbers<[1], [0], [0], [1], [0, 0, 1, 1], [], []>} : vector<128x128xf32>, vector<128x128xf32>, vector<128x128xf32> -> vector<128x128xf32>
    %c2 = arith.constant 2 : index
    %c0_16 = arith.constant 0 : index
    %22 = vector.load %arg5[%c2, %c0_16] : memref<8x128xf32, #tpu.memory_space<vmem>>, vector<1x128xf32>
    %23 = vector.broadcast %22 : vector<1x128xf32> to vector<128x128xf32>
    %24 = arith.addf %21, %23 : vector<128x128xf32>
    %25 = tpu.iota {dimensions = array<i32: 1>} : vector<128x128xi32>
    %c64_i32 = arith.constant 64 : i32
    %26 = vector.broadcast %c64_i32 : i32 to vector<128x128xi32>
    %27 = arith.cmpi slt, %25, %26 : vector<128x128xi32>
    %cst_17 = arith.constant 0.000000e+00 : f32
    %28 = vector.broadcast %cst_17 : f32 to vector<128x128xf32>
    %29 = arith.maximumf %24, %28 : vector<128x128xf32>
    %30 = arith.select %27, %29, %24 : vector<128x128xi1>, vector<128x128xf32>
    %c264 = arith.constant 264 : index
    %c0_18 = arith.constant 0 : index
    %31 = vector.load %arg4[%c264, %c0_18] : memref<648x128xf32, #tpu.memory_space<vmem>>, vector<128x128xf32>
    %cst_19 = arith.constant dense<0.000000e+00> : vector<128x128xf32>
    %32 = tpu.matmul %30, %31, %cst_19 {dimension_numbers = #tpu.dot_dimension_numbers<[1], [0], [0], [1], [0, 0, 1, 1], [], []>} : vector<128x128xf32>, vector<128x128xf32>, vector<128x128xf32> -> vector<128x128xf32>
    %c3 = arith.constant 3 : index
    %c0_20 = arith.constant 0 : index
    %33 = vector.load %arg5[%c3, %c0_20] : memref<8x128xf32, #tpu.memory_space<vmem>>, vector<1x128xf32>
    %34 = vector.broadcast %33 : vector<1x128xf32> to vector<128x128xf32>
    %35 = arith.addf %32, %34 : vector<128x128xf32>
    %36 = vector.extract_strided_slice %35 {offsets = [0, 0], sizes = [128, 9], strides = [1, 1]} : vector<128x128xf32> to vector<128x9xf32>
    %c0_21 = arith.constant 0 : index
    %c0_22 = arith.constant 0 : index
    %c0_23 = arith.constant 0 : index
    %37 = vector.load %arg6[%c0_21, %c0_22, %c0_23] : memref<1x128x9xf32, #tpu.memory_space<vmem>>, vector<1x128x9xf32>
    %38 = vector.shape_cast %37 : vector<1x128x9xf32> to vector<128x9xf32>
    %39 = vector.shape_cast %36 : vector<128x9xf32> to vector<1x128x9xf32>
    tpu.vector_store %arg6[%c0_21, %c0_22, %c0_23], %39 {strides = array<i32>} : memref<1x128x9xf32, #tpu.memory_space<vmem>>, vector<1x128x9xf32>,
    %c0_i32 = arith.constant 0 : i32
    %40 = arith.cmpi eq, %arg1, %c0_i32 : i32
    %41 = arith.extui %40 : i1 to i32
    %c0_i32_24 = arith.constant 0 : i32
    %42 = arith.cmpi ne, %41, %c0_i32_24 : i32
    scf.if %42 {
      %cst_31 = arith.constant 0xFF800000 : f32
      %51 = vector.broadcast %cst_31 : f32 to vector<1x128xf32>
      %c0_32 = arith.constant 0 : index
      %c0_33 = arith.constant 0 : index
      %52 = vector.load %arg8[%c0_32, %c0_33] : memref<1x128xf32, #tpu.memory_space<vmem>>, vector<1x128xf32>
      tpu.vector_store %arg8[%c0_32, %c0_33], %51 {strides = array<i32>} : memref<1x128xf32, #tpu.memory_space<vmem>>, vector<1x128xf32>,
    } else {
    }
    %c0_25 = arith.constant 0 : index
    %c0_26 = arith.constant 0 : index
    %43 = vector.load %arg8[%c0_25, %c0_26] : memref<1x128xf32, #tpu.memory_space<vmem>>, vector<1x128xf32>
    %cst_27 = arith.constant dense<0xFF800000> : vector<128xf32>
    %44 = vector.multi_reduction <maximumf>, %19, %cst_27 [0] : vector<128x128xf32> to vector<128xf32>
    %45 = vector.shape_cast %44 : vector<128xf32> to vector<1x128xf32>
    %46 = arith.maximumf %43, %45 : vector<1x128xf32>
    %c0_28 = arith.constant 0 : index
    %c0_29 = arith.constant 0 : index
    %47 = vector.load %arg8[%c0_28, %c0_29] : memref<1x128xf32, #tpu.memory_space<vmem>>, vector<1x128xf32>
    tpu.vector_store %arg8[%c0_28, %c0_29], %46 {strides = array<i32>} : memref<1x128xf32, #tpu.memory_space<vmem>>, vector<1x128xf32>,
    %c1_i32 = arith.constant 1 : i32
    %48 = arith.cmpi eq, %arg1, %c1_i32 : i32
    %49 = arith.extui %48 : i1 to i32
    %c0_i32_30 = arith.constant 0 : i32
    %50 = arith.cmpi ne, %49, %c0_i32_30 : i32
    scf.if %50 {
      %c0_31 = arith.constant 0 : index
      %c0_32 = arith.constant 0 : index
      %51 = vector.load %arg8[%c0_31, %c0_32] : memref<1x128xf32, #tpu.memory_space<vmem>>, vector<1x128xf32>
      %c392 = arith.constant 392 : index
      %c0_33 = arith.constant 0 : index
      %52 = vector.load %arg4[%c392, %c0_33] : memref<648x128xf32, #tpu.memory_space<vmem>>, vector<128x128xf32>
      %cst_34 = arith.constant dense<0.000000e+00> : vector<1x128xf32>
      %53 = tpu.matmul %51, %52, %cst_34 {dimension_numbers = #tpu.dot_dimension_numbers<[1], [0], [0], [1], [0, 0, 1, 1], [], []>} : vector<1x128xf32>, vector<128x128xf32>, vector<1x128xf32> -> vector<1x128xf32>
      %c4 = arith.constant 4 : index
      %c0_35 = arith.constant 0 : index
      %54 = vector.load %arg5[%c4, %c0_35] : memref<8x128xf32, #tpu.memory_space<vmem>>, vector<1x128xf32>
      %55 = arith.addf %53, %54 : vector<1x128xf32>
      %cst_36 = arith.constant 0.000000e+00 : f32
      %56 = vector.broadcast %cst_36 : f32 to vector<1x128xf32>
      %57 = arith.maximumf %55, %56 : vector<1x128xf32>
      %c520 = arith.constant 520 : index
      %c0_37 = arith.constant 0 : index
      %58 = vector.load %arg4[%c520, %c0_37] : memref<648x128xf32, #tpu.memory_space<vmem>>, vector<128x128xf32>
      %cst_38 = arith.constant dense<0.000000e+00> : vector<1x128xf32>
      %59 = tpu.matmul %57, %58, %cst_38 {dimension_numbers = #tpu.dot_dimension_numbers<[1], [0], [0], [1], [0, 0, 1, 1], [], []>} : vector<1x128xf32>, vector<128x128xf32>, vector<1x128xf32> -> vector<1x128xf32>
      %c5 = arith.constant 5 : index
      %c0_39 = arith.constant 0 : index
      %60 = vector.load %arg5[%c5, %c0_39] : memref<8x128xf32, #tpu.memory_space<vmem>>, vector<1x128xf32>
      %61 = arith.addf %59, %60 : vector<1x128xf32>
      %62 = vector.extract_strided_slice %61 {offsets = [0, 0], sizes = [1, 3], strides = [1, 1]} : vector<1x128xf32> to vector<1x3xf32>
      %63 = arith.addf %62, %3 : vector<1x3xf32>
      %c0_40 = arith.constant 0 : index
      %c0_41 = arith.constant 0 : index
      %c0_42 = arith.constant 0 : index
      %64 = vector.load %arg7[%c0_40, %c0_41, %c0_42] : memref<1x1x3xf32, #tpu.memory_space<vmem>>, vector<1x1x3xf32>
      %65 = vector.shape_cast %64 : vector<1x1x3xf32> to vector<1x3xf32>
      %66 = vector.shape_cast %63 : vector<1x3xf32> to vector<1x1x3xf32>
      tpu.vector_store %arg7[%c0_40, %c0_41, %c0_42], %66 {strides = array<i32>} : memref<1x1x3xf32, #tpu.memory_space<vmem>>, vector<1x1x3xf32>,
    } else {
    }
    return
  }
  func.func @transform_0(%arg0: i32, %arg1: i32) -> (i32, i32, i32) {
    %c0_i32 = arith.constant 0 : i32
    %c0_i32_0 = arith.constant 0 : i32
    return %arg0, %arg1, %c0_i32 : i32, i32, i32
  }
  func.func @transform_1(%arg0: i32, %arg1: i32) -> (i32, i32, i32) {
    %c0_i32 = arith.constant 0 : i32
    %c0_i32_0 = arith.constant 0 : i32
    %c0_i32_1 = arith.constant 0 : i32
    return %arg0, %c0_i32, %c0_i32_0 : i32, i32, i32
  }
  func.func @transform_2(%arg0: i32, %arg1: i32) -> (i32, i32) {
    %c0_i32 = arith.constant 0 : i32
    %c0_i32_0 = arith.constant 0 : i32
    %c0_i32_1 = arith.constant 0 : i32
    return %c0_i32, %c0_i32_0 : i32, i32
  }
  func.func @transform_3(%arg0: i32, %arg1: i32) -> (i32, i32) {
    %c0_i32 = arith.constant 0 : i32
    %c0_i32_0 = arith.constant 0 : i32
    %c0_i32_1 = arith.constant 0 : i32
    return %c0_i32, %c0_i32_0 : i32, i32
  }
  func.func @transform_4(%arg0: i32, %arg1: i32) -> (i32, i32, i32) {
    %c0_i32 = arith.constant 0 : i32
    %c0_i32_0 = arith.constant 0 : i32
    return %arg0, %arg1, %c0_i32 : i32, i32, i32
  }
  func.func @transform_5(%arg0: i32, %arg1: i32) -> (i32, i32, i32) {
    %c0_i32 = arith.constant 0 : i32
    %c0_i32_0 = arith.constant 0 : i32
    %c0_i32_1 = arith.constant 0 : i32
    return %arg0, %c0_i32, %c0_i32_0 : i32, i32, i32
  }
}

</mosaic_0001>

<llo_original>
// kernel: tpu_custom_call.1
$region0: #{tpu_custom_call.1}
  #allocation0 [shape = 'u32[]', space=smem, size = 0x4, offset = 0x4, fixed_abs, tag = 'smem constant byte address 0x4 - core index']
  #allocation1 [shape = 'u32[144,128]{1,0:T(1,128)}', space=vmem, size = 0x12000, scoped, tag = 'internal scratch']
  #allocation2 [shape = 'f32[1,128]{1,0:T(1,128)}', space=vmem, size = 0x200, scoped, tag = 'scratch operand']
  %s0 = inlined_call_operand.vmem [shape: f32[2,256,3], index: 0, kind: input, shape index: {}]
  %s1 = inlined_call_operand.vmem [shape: f32[2,1,3], index: 1, kind: input, shape index: {}]
  %s2 = inlined_call_operand.hbm [shape: f32[648,128], index: 2, kind: input, shape index: {}]
  %s3 = inlined_call_operand.vmem [shape: f32[8,128], index: 3, kind: input, shape index: {}]
  %s4 = inlined_call_operand.vmem [shape: f32[2,256,9], index: 4, kind: output, shape index: {0}]
  %s5 = inlined_call_operand.hbm [shape: f32[2,1,3], index: 5, kind: output, shape index: {1}]
  %6 = xla_tuple %s4, %s5
  %s7 = sld [smem:[#allocation0]]
  $region69: #{tpu_custom_call.1} parent=0
    _
  %s9 = ssub.s32 1, %s7
  %s10 = scalar_select 0, %s9, %s7
  $region1: #{tpu_custom_call.1} parent=0
    #allocation3 [shape = 'u8[331776]{0}', space=vmem, size = 0x51000, scoped, tag = 'input window, operand 2, single buffered']
    #allocation4 [shape = 's32[2]{0}', space=sflag, size = 0x8, scoped, tag = 'scoped memory for tpu_custom_call.1']
    #allocation5 [shape = 's32[2]{0}', space=sflag, size = 0x8, scoped, tag = 'scoped memory for tpu_custom_call.1']
    #allocation6 [shape = 'u8[1024]{0}', space=vmem, size = 0x400, scoped, tag = 'output window, operand 1']
    %11 = vsyncpa [#allocation4], 0
    %12 = vsyncpa [#allocation5], 0
    %s13 = scalar_lea.sflag [#allocation5], 1
    %14 = vsyncpa %s13, 0
    loop: start=0, step=1, limit=6
    $region2: #{tpu_custom_call.1} parent=1 // loop_pre_header
      _
    $region3: #{tpu_custom_call.1} parent=1 // loop_header
      %s16 = sphi 0, %s20
      %p17 = scmp.ge.s32.totalorder %s16, 6
      %s23 = sphi 0, %s35
      %s24 = sphi 0, %s31
      %s25 = sphi 0, %s23
      %s26 = sphi 0, %s24
      %s27 = sphi 0, %s25
      %s28 = sphi 0, %s26
      %s40 = sphi 0, %s42
      %s43 = sphi 0, %s40
      %s44 = sphi 0, %s43
      %s60 = sphi 0, %s44
      %s66 = sphi 0, %s68
      %s69 = sphi 0, %s66
      %s70 = sphi 0, %s69
      %s86 = sphi 0, %s70
      %s90 = sphi 0, %s90
      %s92 = sphi 0, %s90
      %s93 = sphi 0, %s92
      %s107 = sphi 0, %s93
      %s111 = sphi 0, %s111
      %s113 = sphi 0, %s111
      %s114 = sphi 0, %s113
      %s128 = sphi 0, %s114
      %s136 = sphi 0, %s138
      %s139 = sphi 0, %s136
      %s140 = sphi 0, %s139
      %s156 = sphi 0, %s140
      %s162 = sphi 0, %s164
      %s165 = sphi 0, %s162
      %s166 = sphi 0, %s165
      %s182 = sphi 0, %s166
    $region4: #{tpu_custom_call.1} parent=1 // loop_header_branch
      %19 = sbr.rel (%p17) target = $region8
    $region5: #{tpu_custom_call.1} parent=1 // loop_body
      %s21 = ssub.s32 %s16, 1
      %s22 = ssub.s32 %s16, 2
      %s29 = sadd.s32 1, %s24
      %p30 = scmp.ge.s32.totalorder %s29, 2
      %s31 = scalar_select %p30, 0, %s29
      %s32 = sadd.s32 1, %s23
      %s33 = scalar_select %p30, %s32, %s23
      %p34 = scmp.ge.s32.totalorder %s33, 2
      %s35 = scalar_select %p34, 0, %s33
      %s36 = ssub.s32 %s23, %s35
      %s37 = ssub.s32 %s24, %s31
      %s38 = sor.u32 %s36, %s37
      %p39 = scmp.eq.s32.totalorder %s38, 0
      %s41 = sadd.s32 %s40, 1
      %s42 = scalar_select %p39, %s40, %s41
      %p45 = pneg %p39
      %p46 = scmp.eq.s32.totalorder %s16, 3
      %p47 = por %p45, %p46
      %p48 = scmp.ne.s32.totalorder %s40, %s43
      %p49 = scmp.eq.s32.totalorder %s16, 0
      %p50 = por %p48, %p49
      %p51 = scmp.ne.s32.totalorder %s40, %s43
      %p52 = scmp.eq.s32.totalorder %s21, 3
      %p53 = por %p51, %p52
      %p54 = scmp.ne.s32.totalorder %s43, %s44
      %p55 = scmp.eq.s32.totalorder %s21, 0
      %p56 = por %p54, %p55
      %p57 = scmp.ne.s32.totalorder %s43, %s44
      %p58 = scmp.eq.s32.totalorder %s22, 3
      %p59 = por %p57, %p58
      %p61 = scmp.ne.s32.totalorder %s44, %s60
      %p62 = scmp.eq.s32.totalorder %s22, 0
      %p63 = por %p61, %p62
      %s64 = ssub.s32 %s23, %s35
      %p65 = scmp.eq.s32.totalorder %s64, 0
      %s67 = sadd.s32 %s66, 1
      %s68 = scalar_select %p65, %s66, %s67
      %p71 = pneg %p65
      %p72 = scmp.eq.s32.totalorder %s16, 3
      %p73 = por %p71, %p72
      %p74 = scmp.ne.s32.totalorder %s66, %s69
      %p75 = scmp.eq.s32.totalorder %s16, 0
      %p76 = por %p74, %p75
      %p77 = scmp.ne.s32.totalorder %s66, %s69
      %p78 = scmp.eq.s32.totalorder %s21, 3
      %p79 = por %p77, %p78
      %p80 = scmp.ne.s32.totalorder %s69, %s70
      %p81 = scmp.eq.s32.totalorder %s21, 0
      %p82 = por %p80, %p81
      %p83 = scmp.ne.s32.totalorder %s69, %s70
      %p84 = scmp.eq.s32.totalorder %s22, 3
      %p85 = por %p83, %p84
      %p87 = scmp.ne.s32.totalorder %s70, %s86
      %p88 = scmp.eq.s32.totalorder %s22, 0
      %p89 = por %p87, %p88
      %s91 = sadd.s32 %s90, 1
      %p94 = scmp.eq.s32.totalorder %s16, 3
      %p95 = scmp.ne.s32.totalorder %s90, %s92
      %p96 = scmp.eq.s32.totalorder %s16, 0
      %p97 = por %p95, %p96
      %p98 = scmp.ne.s32.totalorder %s90, %s92
      %p99 = scmp.eq.s32.totalorder %s21, 3
      %p100 = por %p98, %p99
      %p101 = scmp.ne.s32.totalorder %s92, %s93
      %p102 = scmp.eq.s32.totalorder %s21, 0
      %p103 = por %p101, %p102
      %p104 = scmp.ne.s32.totalorder %s92, %s93
      %p105 = scmp.eq.s32.totalorder %s22, 3
      %p106 = por %p104, %p105
      %p108 = scmp.ne.s32.totalorder %s93, %s107
      %p109 = scmp.eq.s32.totalorder %s22, 0
      %p110 = por %p108, %p109
      %s112 = sadd.s32 %s111, 1
      %p115 = scmp.eq.s32.totalorder %s16, 3
      %p116 = scmp.ne.s32.totalorder %s111, %s113
      %p117 = scmp.eq.s32.totalorder %s16, 0
      %p118 = por %p116, %p117
      %p119 = scmp.ne.s32.totalorder %s111, %s113
      %p120 = scmp.eq.s32.totalorder %s21, 3
      %p121 = por %p119, %p120
      %p122 = scmp.ne.s32.totalorder %s113, %s114
      %p123 = scmp.eq.s32.totalorder %s21, 0
      %p124 = por %p122, %p123
      %p125 = scmp.ne.s32.totalorder %s113, %s114
      %p126 = scmp.eq.s32.totalorder %s22, 3
      %p127 = por %p125, %p126
      %p129 = scmp.ne.s32.totalorder %s114, %s128
      %p130 = scmp.eq.s32.totalorder %s22, 0
      %p131 = por %p129, %p130
      %s132 = ssub.s32 %s23, %s35
      %s133 = ssub.s32 %s24, %s31
      %s134 = sor.u32 %s132, %s133
      %p135 = scmp.eq.s32.totalorder %s134, 0
      %s137 = sadd.s32 %s136, 1
      %s138 = scalar_select %p135, %s136, %s137
      %p141 = pneg %p135
      %p142 = scmp.eq.s32.totalorder %s16, 3
      %p143 = por %p141, %p142
      %p144 = scmp.ne.s32.totalorder %s136, %s139
      %p145 = scmp.eq.s32.totalorder %s16, 0
      %p146 = por %p144, %p145
      %p147 = scmp.ne.s32.totalorder %s136, %s139
      %p148 = scmp.eq.s32.totalorder %s21, 3
      %p149 = por %p147, %p148
      %p150 = scmp.ne.s32.totalorder %s139, %s140
      %p151 = scmp.eq.s32.totalorder %s21, 0
      %p152 = por %p150, %p151
      %p153 = scmp.ne.s32.totalorder %s139, %s140
      %p154 = scmp.eq.s32.totalorder %s22, 3
      %p155 = por %p153, %p154
      %p157 = scmp.ne.s32.totalorder %s140, %s156
      %p158 = scmp.eq.s32.totalorder %s22, 0
      %p159 = por %p157, %p158
      %s160 = ssub.s32 %s23, %s35
      %p161 = scmp.eq.s32.totalorder %s160, 0
      %s163 = sadd.s32 %s162, 1
      %s164 = scalar_select %p161, %s162, %s163
      %p167 = pneg %p161
      %p168 = scmp.eq.s32.totalorder %s16, 3
      %p169 = por %p167, %p168
      %p170 = scmp.ne.s32.totalorder %s162, %s165
      %p171 = scmp.eq.s32.totalorder %s16, 0
      %p172 = por %p170, %p171
      %p173 = scmp.ne.s32.totalorder %s162, %s165
      %p174 = scmp.eq.s32.totalorder %s21, 3
      %p175 = por %p173, %p174
      %p176 = scmp.ne.s32.totalorder %s165, %s166
      %p177 = scmp.eq.s32.totalorder %s21, 0
      %p178 = por %p176, %p177
      %p179 = scmp.ne.s32.totalorder %s165, %s166
      %p180 = scmp.eq.s32.totalorder %s22, 3
      %p181 = por %p179, %p180
      %p183 = scmp.ne.s32.totalorder %s166, %s182
      %p184 = scmp.eq.s32.totalorder %s22, 0
      %p185 = por %p183, %p184
      %p186 = scmp.le.s32.totalorder 1, %s16
      %p187 = scmp.lt.s32.totalorder %s16, 5
      %p188 = pnand %p186, %p187
      %p189 = pneg %p188
      // Predicated region
      $region9: #{tpu_custom_call.1} parent=5 // pred_check
        _
      $region10: #{tpu_custom_call.1} parent=5 // pred_check_branch
        %191 = sbr.rel (%p188) target = $region12
      $region11: #{tpu_custom_call.1} parent=5 // pred_region
        %s192 = ssub.s32 %s16, 1
        // Predicated region
        $region13: #{tpu_custom_call.1} parent=11 // pred_check
          %p193 = pneg %p103
        $region14: #{tpu_custom_call.1} parent=11 // pred_check_branch
          %195 = sbr.rel (%p193) target = $region16
        $region15: #{tpu_custom_call.1} parent=11 // pred_region
          %s197 = ssub.s32 10368, 10368
          %198 = vsyncadd [#allocation4], %s197
          %s199 = sshll.u32 [#allocation3], 4
          %s200 = int_to_ptr.vmem [resolvable:$true] %s199
          %205 = dma.hbm_to_vmem [thread:$0]  %s2, 10368, %s200, [#allocation4], 128, 128, 8
        $region16: #{tpu_custom_call.1} parent=11 // pred_fallthru
          _
        // Predicated region
        $region17: #{tpu_custom_call.1} parent=11 // pred_check
          %p206 = pneg %p124
        $region18: #{tpu_custom_call.1} parent=11 // pred_check_branch
          %208 = sbr.rel (%p206) target = $region20
        $region19: #{tpu_custom_call.1} parent=11 // pred_region
          _
        $region20: #{tpu_custom_call.1} parent=11 // pred_fallthru
          _
      $region12: #{tpu_custom_call.1} parent=5 // pred_fallthru
        _
      %p209 = scmp.lt.s32.totalorder %s16, 4
      // Predicated region
      $region21: #{tpu_custom_call.1} parent=5 // pred_check
        %p210 = pneg %p209
      $region22: #{tpu_custom_call.1} parent=5 // pred_check_branch
        %212 = sbr.rel (%p210) target = $region24
      $region23: #{tpu_custom_call.1} parent=5 // pred_region
        // Predicated region
        $region25: #{tpu_custom_call.1} parent=23 // pred_check
          %p213 = pneg %p50
        $region26: #{tpu_custom_call.1} parent=23 // pred_check_branch
          %215 = sbr.rel (%p213) target = $region28
        $region27: #{tpu_custom_call.1} parent=23 // pred_region
          %s216 = smul.u32 16, %s24
          %p217 = scmp.lt.s32.totalorder %s23, 1
          %s218 = scalar_select %p217, %s23, 1
          %p219 = scmp.lt.s32.totalorder %s216, 31
          %s220 = scalar_select %p219, %s216, 31
          %s221 = smul.addr %s218, 32
          %s222 = sadd.s32 %s220, %s221
          %s223 = smul.addr %s222, 8
          %s224 = scalar_lea.vmem %s0, %s223
          %s225 = smul.u32 16, %s24
        $region28: #{tpu_custom_call.1} parent=23 // pred_fallthru
          _
        // Predicated region
        $region29: #{tpu_custom_call.1} parent=23 // pred_check
          %p226 = pneg %p76
        $region30: #{tpu_custom_call.1} parent=23 // pred_check_branch
          %228 = sbr.rel (%p226) target = $region32
        $region31: #{tpu_custom_call.1} parent=23 // pred_region
          %p229 = scmp.lt.s32.totalorder %s23, 1
          %s230 = scalar_select %p229, %s23, 1
          %s231 = scalar_lea.vmem %s1, %s230
        $region32: #{tpu_custom_call.1} parent=23 // pred_fallthru
          _
      $region24: #{tpu_custom_call.1} parent=5 // pred_fallthru
        _
      %p232 = scmp.le.s32.totalorder 1, %s16
      %p233 = scmp.lt.s32.totalorder %s16, 5
      %p234 = pnand %p232, %p233
      %p235 = pneg %p234
      // Predicated region
      $region33: #{tpu_custom_call.1} parent=5 // pred_check
        _
      $region34: #{tpu_custom_call.1} parent=5 // pred_check_branch
        %237 = sbr.rel (%p234) target = $region36
      $region35: #{tpu_custom_call.1} parent=5 // pred_region
        %s238 = ssub.s32 %s16, 1
        // Predicated region
        $region37: #{tpu_custom_call.1} parent=35 // pred_check
          %p239 = pneg %p103
        $region38: #{tpu_custom_call.1} parent=35 // pred_check_branch
          %241 = sbr.rel (%p239) target = $region40
        $region39: #{tpu_custom_call.1} parent=35 // pred_region
          %242 = dma.done [#allocation4], 10368
        $region40: #{tpu_custom_call.1} parent=35 // pred_fallthru
          _
        %s243 = smul.u32 16, %s26
        %p244 = scmp.lt.s32.totalorder %s25, 1
        %s245 = scalar_select %p244, %s25, 1
        %p246 = scmp.lt.s32.totalorder %s243, 31
        %s247 = scalar_select %p246, %s243, 31
        %s248 = smul.addr %s245, 32
        %s249 = sadd.s32 %s247, %s248
        %s250 = smul.addr %s249, 8
        %s251 = scalar_lea.vmem %s0, %s250
        %p252 = pneg %p56
        %p253 = pneg %p53
        %p254 = scmp.lt.s32.totalorder %s25, 1
        %s255 = scalar_select %p254, %s25, 1
        %s256 = scalar_lea.vmem %s1, %s255
        %p257 = pneg %p82
        %p258 = pneg %p79
        %p259 = pneg %p103
        %p260 = pneg %p100
        %p261 = pneg %p124
        %p262 = pneg %p121
        %p263 = pneg %p152
        %p264 = pneg %p149
        %s265 = smul.u32 16, %s26
        %p266 = scmp.lt.s32.totalorder %s25, 1
        %s267 = scalar_select %p266, %s25, 1
        %p268 = scmp.lt.s32.totalorder %s265, 31
        %s269 = scalar_select %p268, %s265, 31
        %s270 = smul.addr %s267, 32
        %s271 = sadd.s32 %s269, %s270
        %s272 = smul.addr %s271, 8
        %s273 = scalar_lea.vmem %s4, %s272
        %p274 = pneg %p178
        %p275 = pneg %p175
        %s276 = sand.u32 %s165, 1
        %s277 = scalar_lea.sflag [#allocation5], %s276
        %s278 = sand.u32 %s165, 1
        %s279 = scalar_lea.vmem [#allocation6], %s278
        %s280 = smul.u32 16, %s26
        %p281 = scmp.lt.s32.totalorder %s25, 1
        %s282 = scalar_select %p281, %s25, 1
        %p283 = scmp.lt.s32.totalorder %s280, 31
        %s284 = scalar_select %p283, %s280, 31
        %s285 = smul.addr %s282, 32
        %s286 = sadd.s32 %s284, %s285
        %s287 = smul.addr %s286, 8
        %s288 = scalar_lea.vmem %s0, %s287
        %s289 = smul.u32 16, %s26
        %p290 = scmp.lt.s32.totalorder %s25, 1
        %s291 = scalar_select %p290, %s25, 1
        %s292 = scalar_lea.vmem %s1, %s291
        %s293 = smul.u32 16, %s26
        %p294 = scmp.lt.s32.totalorder %s25, 1
        %s295 = scalar_select %p294, %s25, 1
        %p296 = scmp.lt.s32.totalorder %s293, 31
        %s297 = scalar_select %p296, %s293, 31
        %s298 = smul.addr %s295, 32
        %s299 = sadd.s32 %s297, %s298
        %s300 = smul.addr %s299, 8
        %s301 = scalar_lea.vmem %s4, %s300
        %s302 = smul.u32 16, %s26
        %v303 = vld [vmem:[%s288] sm:$0xff]
        %v304 = vld [vmem:[%s288 + $0x8] sm:$0xff]
        %v305 = vld [vmem:[%s288 + $0x10] sm:$0xff]
        %v306 = vld [vmem:[%s288 + $0x18] sm:$0xff]
        %v307 = vld [vmem:[%s288 + $0x20] sm:$0xff]
        %v308 = vld [vmem:[%s288 + $0x28] sm:$0xff]
        %v309 = vld [vmem:[%s288 + $0x30] sm:$0xff]
        %v310 = vld [vmem:[%s288 + $0x38] sm:$0xff]
        %v311 = vld [vmem:[%s288 + $0x40] sm:$0xff]
        %v312 = vld [vmem:[%s288 + $0x48] sm:$0xff]
        %v313 = vld [vmem:[%s288 + $0x50] sm:$0xff]
        %v314 = vld [vmem:[%s288 + $0x58] sm:$0xff]
        %v315 = vld [vmem:[%s288 + $0x60] sm:$0xff]
        %v316 = vld [vmem:[%s288 + $0x68] sm:$0xff]
        %v317 = vld [vmem:[%s288 + $0x70] sm:$0xff]
        %v318 = vld [vmem:[%s288 + $0x78] sm:$0xff]
        %v319 = vld [vmem:[%s292] sm:$0x1]
        %v321 = vlaneseq
        %v322 = vshrl.u32 %v321, 7
        %v323 = vsub.s32 0, %v322
        %v324 = vrot.slane %v319, %v323
        %v326 = vsub.f32 %v303, %v324
        %v327 = vsub.f32 %v304, %v324
        %v328 = vsub.f32 %v305, %v324
        %v329 = vsub.f32 %v306, %v324
        %v330 = vsub.f32 %v307, %v324
        %v331 = vsub.f32 %v308, %v324
        %v332 = vsub.f32 %v309, %v324
        %v333 = vsub.f32 %v310, %v324
        %v334 = vsub.f32 %v311, %v324
        %v335 = vsub.f32 %v312, %v324
        %v336 = vsub.f32 %v313, %v324
        %v337 = vsub.f32 %v314, %v324
        %v338 = vsub.f32 %v315, %v324
        %v339 = vsub.f32 %v316, %v324
        %v340 = vsub.f32 %v317, %v324
        %v341 = vsub.f32 %v318, %v324
        %v342 = vld [vmem:[#allocation3] sm:$0x7]
        %v343 = vld [vmem:[%s3] sm:$0x1]
        %v344 = vlaneseq
        %v345 = vshrl.u32 %v344, 7
        %v346 = vsub.s32 0, %v345
        %v347 = vrot.slane %v343, %v346
        %vm348 = vcmask 23552
        %v350 = vsel %vm348, %v326, 0
        %v353 = vsel %vm348, %v327, 0
        %v356 = vsel %vm348, %v328, 0
        %v359 = vsel %vm348, %v329, 0
        %v362 = vsel %vm348, %v330, 0
        %v365 = vsel %vm348, %v331, 0
        %v368 = vsel %vm348, %v332, 0
        %v371 = vsel %vm348, %v333, 0
        %v374 = vsel %vm348, %v334, 0
        %v377 = vsel %vm348, %v335, 0
        %v380 = vsel %vm348, %v336, 0
        %v383 = vsel %vm348, %v337, 0
        %v386 = vsel %vm348, %v338, 0
        %v389 = vsel %vm348, %v339, 0
        %v392 = vsel %vm348, %v340, 0
        %v395 = vsel %vm348, %v341, 0
        %vm397 = vcmask 1042432
        %v399 = vsel %vm397, %v342, 0
        %401 = vmatprep.subr.mxu0 0.0
        %402 = vmatpush1.msra.mxu0 %v399
        %403 = vmatprep.subr.mxu0 0.0
        %404 = vmatpush1.msra.mxu0 0.0
        %405 = vmatprep.subr.mxu0 0.0
        %406 = vmatpush1.msra.mxu0 0.0
        %407 = vmatprep.subr.mxu0 0.0
        %408 = vmatpush1.msra.mxu0 0.0
        %409 = vmatprep.subr.mxu0 0.0
        %410 = vmatpush1.msra.mxu0 0.0
        %411 = vmatprep.subr.mxu0 0.0
        %412 = vmatpush1.msra.mxu0 0.0
        %413 = vmatprep.subr.mxu0 0.0
        %414 = vmatpush1.msra.mxu0 0.0
        %415 = vmatprep.subr.mxu0 0.0
        %416 = vmatpush1.msra.mxu0 0.0
        %417 = vmatprep.subr.mxu0 0.0
        %418 = vmatpush1.msra.mxu0 0.0
        %419 = vmatprep.subr.mxu0 0.0
        %420 = vmatpush1.msra.mxu0 0.0
        %421 = vmatprep.subr.mxu0 0.0
        %422 = vmatpush1.msra.mxu0 0.0
        %423 = vmatprep.subr.mxu0 0.0
        %424 = vmatpush1.msra.mxu0 0.0
        %425 = vmatprep.subr.mxu0 0.0
        %426 = vmatpush1.msra.mxu0 0.0
        %427 = vmatprep.subr.mxu0 0.0
        %428 = vmatpush1.msra.mxu0 0.0
        %429 = vmatprep.subr.mxu0 0.0
        %430 = vmatpush1.msra.mxu0 0.0
        %431 = vmatprep.subr.mxu0 0.0
        %432 = vmatpush1.msra.mxu0 0.0
        %433 = vmatprep.subr.mxu0 0.0
        %434 = vmatpush1.msra.mxu0 0.0
        %435 = vmatprep.subr.mxu0 0.0
        %436 = vmatpush1.msra.mxu0 0.0
        %437 = vmatprep.subr.mxu0 0.0
        %438 = vmatpush1.msra.mxu0 0.0
        %439 = vmatprep.subr.mxu0 0.0
        %440 = vmatpush1.msra.mxu0 0.0
        %441 = vmatprep.subr.mxu0 0.0
        %442 = vmatpush1.msra.mxu0 0.0
        %443 = vmatprep.subr.mxu0 0.0
        %444 = vmatpush1.msra.mxu0 0.0
        %445 = vmatprep.subr.mxu0 0.0
        %446 = vmatpush1.msra.mxu0 0.0
        %447 = vmatprep.subr.mxu0 0.0
        %448 = vmatpush1.msra.mxu0 0.0
        %449 = vmatprep.subr.mxu0 0.0
        %450 = vmatpush1.msra.mxu0 0.0
        %451 = vmatprep.subr.mxu0 0.0
        %452 = vmatpush1.msra.mxu0 0.0
        %453 = vmatprep.subr.mxu0 0.0
        %454 = vmatpush1.msra.mxu0 0.0
        %455 = vmatprep.subr.mxu0 0.0
        %456 = vmatpush1.msra.mxu0 0.0
        %457 = vmatprep.subr.mxu0 0.0
        %458 = vmatpush1.msra.mxu0 0.0
        %459 = vmatprep.subr.mxu0 0.0
        %460 = vmatpush1.msra.mxu0 0.0
        %461 = vmatprep.subr.mxu0 0.0
        %462 = vmatpush1.msra.mxu0 0.0
        %463 = vmatprep.subr.mxu0 0.0
        %464 = vmatpush1.msra.mxu0 0.0
        %465 = vmatprep.mubr.f32.mxu0 0.0
        %466 = vmatmul.mubr.f32.gmra.mrb[0].mxu0 %v350
        %v467 = vpop.f32.mrb[0].mxu0
        %v468 = vadd.f32 %v347, %v467
        %v469 = vpop.f32.mrb[0].mxu0
        %470 = vmatprep.mubr.f32.mxu0 0.0
        %471 = vmatmul.mubr.f32.gmra.mrb[0].mxu0 %v353
        %v472 = vpop.f32.mrb[0].mxu0
        %v473 = vadd.f32 %v347, %v472
        %v474 = vpop.f32.mrb[0].mxu0
        %475 = vmatprep.mubr.f32.mxu0 0.0
        %476 = vmatmul.mubr.f32.gmra.mrb[0].mxu0 %v356
        %v477 = vpop.f32.mrb[0].mxu0
        %v478 = vadd.f32 %v347, %v477
        %v479 = vpop.f32.mrb[0].mxu0
        %480 = vmatprep.mubr.f32.mxu0 0.0
        %481 = vmatmul.mubr.f32.gmra.mrb[0].mxu0 %v359
        %v482 = vpop.f32.mrb[0].mxu0
        %v483 = vadd.f32 %v347, %v482
        %v484 = vpop.f32.mrb[0].mxu0
        %485 = vmatprep.mubr.f32.mxu0 0.0
        %486 = vmatmul.mubr.f32.gmra.mrb[0].mxu0 %v362
        %v487 = vpop.f32.mrb[0].mxu0
        %v488 = vadd.f32 %v347, %v487
        %v489 = vpop.f32.mrb[0].mxu0
        %490 = vmatprep.mubr.f32.mxu0 0.0
        %491 = vmatmul.mubr.f32.gmra.mrb[0].mxu0 %v365
        %v492 = vpop.f32.mrb[0].mxu0
        %v493 = vadd.f32 %v347, %v492
        %v494 = vpop.f32.mrb[0].mxu0
        %495 = vmatprep.mubr.f32.mxu0 0.0
        %496 = vmatmul.mubr.f32.gmra.mrb[0].mxu0 %v368
        %v497 = vpop.f32.mrb[0].mxu0
        %v498 = vadd.f32 %v347, %v497
        %v499 = vpop.f32.mrb[0].mxu0
        %500 = vmatprep.mubr.f32.mxu0 0.0
        %501 = vmatmul.mubr.f32.gmra.mrb[0].mxu0 %v371
        %v502 = vpop.f32.mrb[0].mxu0
        %v503 = vadd.f32 %v347, %v502
        %v504 = vpop.f32.mrb[0].mxu0
        %505 = vmatprep.mubr.f32.mxu0 0.0
        %506 = vmatmul.mubr.f32.gmra.mrb[0].mxu0 %v374
        %v507 = vpop.f32.mrb[0].mxu0
        %v508 = vadd.f32 %v347, %v507
        %v509 = vpop.f32.mrb[0].mxu0
        %510 = vmatprep.mubr.f32.mxu0 0.0
        %511 = vmatmul.mubr.f32.gmra.mrb[0].mxu0 %v377
        %v512 = vpop.f32.mrb[0].mxu0
        %v513 = vadd.f32 %v347, %v512
        %v514 = vpop.f32.mrb[0].mxu0
        %515 = vmatprep.mubr.f32.mxu0 0.0
        %516 = vmatmul.mubr.f32.gmra.mrb[0].mxu0 %v380
        %v517 = vpop.f32.mrb[0].mxu0
        %v518 = vadd.f32 %v347, %v517
        %v519 = vpop.f32.mrb[0].mxu0
        %520 = vmatprep.mubr.f32.mxu0 0.0
        %521 = vmatmul.mubr.f32.gmra.mrb[0].mxu0 %v383
        %v522 = vpop.f32.mrb[0].mxu0
        %v523 = vadd.f32 %v347, %v522
        %v524 = vpop.f32.mrb[0].mxu0
        %525 = vmatprep.mubr.f32.mxu0 0.0
        %526 = vmatmul.mubr.f32.gmra.mrb[0].mxu0 %v386
        %v527 = vpop.f32.mrb[0].mxu0
        %v528 = vadd.f32 %v347, %v527
        %v529 = vpop.f32.mrb[0].mxu0
        %530 = vmatprep.mubr.f32.mxu0 0.0
        %531 = vmatmul.mubr.f32.gmra.mrb[0].mxu0 %v389
        %v532 = vpop.f32.mrb[0].mxu0
        %v533 = vadd.f32 %v347, %v532
        %v534 = vpop.f32.mrb[0].mxu0
        %535 = vmatprep.mubr.f32.mxu0 0.0
        %536 = vmatmul.mubr.f32.gmra.mrb[0].mxu0 %v392
        %v537 = vpop.f32.mrb[0].mxu0
        %v538 = vadd.f32 %v347, %v537
        %v539 = vpop.f32.mrb[0].mxu0
        %540 = vmatprep.mubr.f32.mxu0 0.0
        %541 = vmatmul.mubr.f32.gmra.mrb[0].mxu0 %v395
        %v542 = vpop.f32.mrb[0].mxu0
        %v543 = vadd.f32 %v347, %v542
        %v544 = vpop.f32.mrb[0].mxu0
        %545 = vdwg.mxu0
        %v546 = vmax.f32 %v468, 0.0
        %v547 = vmax.f32 %v473, 0.0
        %v548 = vmax.f32 %v478, 0.0
        %v549 = vmax.f32 %v483, 0.0
        %v550 = vmax.f32 %v488, 0.0
        %v551 = vmax.f32 %v493, 0.0
        %v552 = vmax.f32 %v498, 0.0
        %v553 = vmax.f32 %v503, 0.0
        %v554 = vmax.f32 %v508, 0.0
        %v555 = vmax.f32 %v513, 0.0
        %v556 = vmax.f32 %v518, 0.0
        %v557 = vmax.f32 %v523, 0.0
        %v558 = vmax.f32 %v528, 0.0
        %v559 = vmax.f32 %v533, 0.0
        %v560 = vmax.f32 %v538, 0.0
        %v561 = vmax.f32 %v543, 0.0
        %v562 = vld [vmem:[#allocation3 + $0x8] sm:$0xff]
        %v563 = vld [vmem:[#allocation3 + $0x10] sm:$0xff]
        %v564 = vld [vmem:[#allocation3 + $0x18] sm:$0xff]
        %v565 = vld [vmem:[#allocation3 + $0x20] sm:$0xff]
        %v566 = vld [vmem:[#allocation3 + $0x28] sm:$0xff]
        %v567 = vld [vmem:[#allocation3 + $0x30] sm:$0xff]
        %v568 = vld [vmem:[#allocation3 + $0x38] sm:$0xff]
        %v569 = vld [vmem:[#allocation3 + $0x40] sm:$0xff]
        %v570 = vld [vmem:[#allocation3 + $0x48] sm:$0xff]
        %v571 = vld [vmem:[#allocation3 + $0x50] sm:$0xff]
        %v572 = vld [vmem:[#allocation3 + $0x58] sm:$0xff]
        %v573 = vld [vmem:[#allocation3 + $0x60] sm:$0xff]
        %v574 = vld [vmem:[#allocation3 + $0x68] sm:$0xff]
        %v575 = vld [vmem:[#allocation3 + $0x70] sm:$0xff]
        %v576 = vld [vmem:[#allocation3 + $0x78] sm:$0xff]
        %v577 = vld [vmem:[#allocation3 + $0x80] sm:$0xff]
        %v578 = vld [vmem:[%s3 + $0x1] sm:$0x1]
        %v579 = vlaneseq
        %v580 = vshrl.u32 %v579, 7
        %v581 = vsub.s32 0, %v580
        %v582 = vrot.slane %v578, %v581
        %583 = vmatprep.subr.mxu0 0.0
        %584 = vmatpush1.msra.mxu0 %v562
        %585 = vmatprep.subr.mxu0 0.0
        %586 = vmatpush1.msra.mxu0 %v563
        %587 = vmatprep.subr.mxu0 0.0
        %588 = vmatpush1.msra.mxu0 %v564
        %589 = vmatprep.subr.mxu0 0.0
        %590 = vmatpush1.msra.mxu0 %v565
        %591 = vmatprep.subr.mxu0 0.0
        %592 = vmatpush1.msra.mxu0 %v566
        %593 = vmatprep.subr.mxu0 0.0
        %594 = vmatpush1.msra.mxu0 %v567
        %595 = vmatprep.subr.mxu0 0.0
        %596 = vmatpush1.msra.mxu0 %v568
        %597 = vmatprep.subr.mxu0 0.0
        %598 = vmatpush1.msra.mxu0 %v569
        %599 = vmatprep.subr.mxu0 0.0
        %600 = vmatpush1.msra.mxu0 %v570
        %601 = vmatprep.subr.mxu0 0.0
        %602 = vmatpush1.msra.mxu0 %v571
        %603 = vmatprep.subr.mxu0 0.0
        %604 = vmatpush1.msra.mxu0 %v572
        %605 = vmatprep.subr.mxu0 0.0
        %606 = vmatpush1.msra.mxu0 %v573
        %607 = vmatprep.subr.mxu0 0.0
        %608 = vmatpush1.msra.mxu0 %v574
        %609 = vmatprep.subr.mxu0 0.0
        %610 = vmatpush1.msra.mxu0 %v575
        %611 = vmatprep.subr.mxu0 0.0
        %612 = vmatpush1.msra.mxu0 %v576
        %613 = vmatprep.subr.mxu0 0.0
        %614 = vmatpush1.msra.mxu0 %v577
        %615 = vmatprep.subr.mxu0 0.0
        %616 = vmatpush1.msra.mxu0 0.0
        %617 = vmatprep.subr.mxu0 0.0
        %618 = vmatpush1.msra.mxu0 0.0
        %619 = vmatprep.subr.mxu0 0.0
        %620 = vmatpush1.msra.mxu0 0.0
        %621 = vmatprep.subr.mxu0 0.0
        %622 = vmatpush1.msra.mxu0 0.0
        %623 = vmatprep.subr.mxu0 0.0
        %624 = vmatpush1.msra.mxu0 0.0
        %625 = vmatprep.subr.mxu0 0.0
        %626 = vmatpush1.msra.mxu0 0.0
        %627 = vmatprep.subr.mxu0 0.0
        %628 = vmatpush1.msra.mxu0 0.0
        %629 = vmatprep.subr.mxu0 0.0
        %630 = vmatpush1.msra.mxu0 0.0
        %631 = vmatprep.subr.mxu0 0.0
        %632 = vmatpush1.msra.mxu0 0.0
        %633 = vmatprep.subr.mxu0 0.0
        %634 = vmatpush1.msra.mxu0 0.0
        %635 = vmatprep.subr.mxu0 0.0
        %636 = vmatpush1.msra.mxu0 0.0
        %637 = vmatprep.subr.mxu0 0.0
        %638 = vmatpush1.msra.mxu0 0.0
        %639 = vmatprep.subr.mxu0 0.0
        %640 = vmatpush1.msra.mxu0 0.0
        %641 = vmatprep.subr.mxu0 0.0
        %642 = vmatpush1.msra.mxu0 0.0
        %643 = vmatprep.subr.mxu0 0.0
        %644 = vmatpush1.msra.mxu0 0.0
        %645 = vmatprep.subr.mxu0 0.0
        %646 = vmatpush1.msra.mxu0 0.0
        %647 = vmatprep.mubr.f32.mxu0 0.0
        %648 = vmatmul.mubr.f32.gmra.mrb[0].mxu0 %v546
        %v649 = vpop.f32.mrb[0].mxu0
        %v650 = vadd.f32 %v582, %v649
        %v651 = vpop.f32.mrb[0].mxu0
        %652 = vmatprep.mubr.f32.mxu0 0.0
        %653 = vmatmul.mubr.f32.gmra.mrb[0].mxu0 %v547
        %v654 = vpop.f32.mrb[0].mxu0
        %v655 = vadd.f32 %v582, %v654
        %v656 = vpop.f32.mrb[0].mxu0
        %657 = vmatprep.mubr.f32.mxu0 0.0
        %658 = vmatmul.mubr.f32.gmra.mrb[0].mxu0 %v548
        %v659 = vpop.f32.mrb[0].mxu0
        %v660 = vadd.f32 %v582, %v659
        %v661 = vpop.f32.mrb[0].mxu0
        %662 = vmatprep.mubr.f32.mxu0 0.0
        %663 = vmatmul.mubr.f32.gmra.mrb[0].mxu0 %v549
        %v664 = vpop.f32.mrb[0].mxu0
        %v665 = vadd.f32 %v582, %v664
        %v666 = vpop.f32.mrb[0].mxu0
        %667 = vmatprep.mubr.f32.mxu0 0.0
        %668 = vmatmul.mubr.f32.gmra.mrb[0].mxu0 %v550
        %v669 = vpop.f32.mrb[0].mxu0
        %v670 = vadd.f32 %v582, %v669
        %v671 = vpop.f32.mrb[0].mxu0
        %672 = vmatprep.mubr.f32.mxu0 0.0
        %673 = vmatmul.mubr.f32.gmra.mrb[0].mxu0 %v551
        %v674 = vpop.f32.mrb[0].mxu0
        %v675 = vadd.f32 %v582, %v674
        %v676 = vpop.f32.mrb[0].mxu0
        %677 = vmatprep.mubr.f32.mxu0 0.0
        %678 = vmatmul.mubr.f32.gmra.mrb[0].mxu0 %v552
        %v679 = vpop.f32.mrb[0].mxu0
        %v680 = vadd.f32 %v582, %v679
        %v681 = vpop.f32.mrb[0].mxu0
        %682 = vmatprep.mubr.f32.mxu0 0.0
        %683 = vmatmul.mubr.f32.gmra.mrb[0].mxu0 %v553
        %v684 = vpop.f32.mrb[0].mxu0
        %v685 = vadd.f32 %v582, %v684
        %v686 = vpop.f32.mrb[0].mxu0
        %687 = vmatprep.mubr.f32.mxu0 0.0
        %688 = vmatmul.mubr.f32.gmra.mrb[0].mxu0 %v554
        %v689 = vpop.f32.mrb[0].mxu0
        %v690 = vadd.f32 %v582, %v689
        %v691 = vpop.f32.mrb[0].mxu0
        %692 = vmatprep.mubr.f32.mxu0 0.0
        %693 = vmatmul.mubr.f32.gmra.mrb[0].mxu0 %v555
        %v694 = vpop.f32.mrb[0].mxu0
        %v695 = vadd.f32 %v582, %v694
        %v696 = vpop.f32.mrb[0].mxu0
        %697 = vmatprep.mubr.f32.mxu0 0.0
        %698 = vmatmul.mubr.f32.gmra.mrb[0].mxu0 %v556
        %v699 = vpop.f32.mrb[0].mxu0
        %v700 = vadd.f32 %v582, %v699
        %v701 = vpop.f32.mrb[0].mxu0
        %702 = vmatprep.mubr.f32.mxu0 0.0
        %703 = vmatmul.mubr.f32.gmra.mrb[0].mxu0 %v557
        %v704 = vpop.f32.mrb[0].mxu0
        %v705 = vadd.f32 %v582, %v704
        %v706 = vpop.f32.mrb[0].mxu0
        %707 = vmatprep.mubr.f32.mxu0 0.0
        %708 = vmatmul.mubr.f32.gmra.mrb[0].mxu0 %v558
        %v709 = vpop.f32.mrb[0].mxu0
        %v710 = vadd.f32 %v582, %v709
        %v711 = vpop.f32.mrb[0].mxu0
        %712 = vmatprep.mubr.f32.mxu0 0.0
        %713 = vmatmul.mubr.f32.gmra.mrb[0].mxu0 %v559
        %v714 = vpop.f32.mrb[0].mxu0
        %v715 = vadd.f32 %v582, %v714
        %v716 = vpop.f32.mrb[0].mxu0
        %717 = vmatprep.mubr.f32.mxu0 0.0
        %718 = vmatmul.mubr.f32.gmra.mrb[0].mxu0 %v560
        %v719 = vpop.f32.mrb[0].mxu0
        %v720 = vadd.f32 %v582, %v719
        %v721 = vpop.f32.mrb[0].mxu0
        %722 = vmatprep.mubr.f32.mxu0 0.0
        %723 = vmatmul.mubr.f32.gmra.mrb[0].mxu0 %v561
        %v724 = vpop.f32.mrb[0].mxu0
        %v725 = vadd.f32 %v582, %v724
        %v726 = vpop.f32.mrb[0].mxu0
        %727 = vdwg.mxu0
        %v728 = vmax.f32 %v650, 0.0
        %v729 = vmax.f32 %v655, 0.0
        %v730 = vmax.f32 %v660, 0.0
        %v731 = vmax.f32 %v665, 0.0
        %v732 = vmax.f32 %v670, 0.0
        %v733 = vmax.f32 %v675, 0.0
        %v734 = vmax.f32 %v680, 0.0
        %v735 = vmax.f32 %v685, 0.0
        %v736 = vmax.f32 %v690, 0.0
        %v737 = vmax.f32 %v695, 0.0
        %v738 = vmax.f32 %v700, 0.0
        %v739 = vmax.f32 %v705, 0.0
        %v740 = vmax.f32 %v710, 0.0
        %v741 = vmax.f32 %v715, 0.0
        %v742 = vmax.f32 %v720, 0.0
        %v743 = vmax.f32 %v725, 0.0
        %v744 = vld [vmem:[#allocation3 + $0x88] sm:$0xff]
        %v745 = vld [vmem:[#allocation3 + $0x90] sm:$0xff]
        %v746 = vld [vmem:[#allocation3 + $0x98] sm:$0xff]
        %v747 = vld [vmem:[#allocation3 + $0xa0] sm:$0xff]
        %v748 = vld [vmem:[#allocation3 + $0xa8] sm:$0xff]
        %v749 = vld [vmem:[#allocation3 + $0xb0] sm:$0xff]
        %v750 = vld [vmem:[#allocation3 + $0xb8] sm:$0xff]
        %v751 = vld [vmem:[#allocation3 + $0xc0] sm:$0xff]
        %v752 = vld [vmem:[#allocation3 + $0xc8] sm:$0xff]
        %v753 = vld [vmem:[#allocation3 + $0xd0] sm:$0xff]
        %v754 = vld [vmem:[#allocation3 + $0xd8] sm:$0xff]
        %v755 = vld [vmem:[#allocation3 + $0xe0] sm:$0xff]
        %v756 = vld [vmem:[#allocation3 + $0xe8] sm:$0xff]
        %v757 = vld [vmem:[#allocation3 + $0xf0] sm:$0xff]
        %v758 = vld [vmem:[#allocation3 + $0xf8] sm:$0xff]
        %v759 = vld [vmem:[#allocation3 + $0x100] sm:$0xff]
        %v760 = vld [vmem:[%s3 + $0x2] sm:$0x1]
        %v761 = vlaneseq
        %v762 = vshrl.u32 %v761, 7
        %v763 = vsub.s32 0, %v762
        %v764 = vrot.slane %v760, %v763
        %765 = vmatprep.subr.mxu0 0.0
        %766 = vmatpush1.msra.mxu0 %v744
        %767 = vmatprep.subr.mxu0 0.0
        %768 = vmatpush1.msra.mxu0 %v745
        %769 = vmatprep.subr.mxu0 0.0
        %770 = vmatpush1.msra.mxu0 %v746
        %771 = vmatprep.subr.mxu0 0.0
        %772 = vmatpush1.msra.mxu0 %v747
        %773 = vmatprep.subr.mxu0 0.0
        %774 = vmatpush1.msra.mxu0 %v748
        %775 = vmatprep.subr.mxu0 0.0
        %776 = vmatpush1.msra.mxu0 %v749
        %777 = vmatprep.subr.mxu0 0.0
        %778 = vmatpush1.msra.mxu0 %v750
        %779 = vmatprep.subr.mxu0 0.0
        %780 = vmatpush1.msra.mxu0 %v751
        %781 = vmatprep.subr.mxu0 0.0
        %782 = vmatpush1.msra.mxu0 %v752
        %783 = vmatprep.subr.mxu0 0.0
        %784 = vmatpush1.msra.mxu0 %v753
        %785 = vmatprep.subr.mxu0 0.0
        %786 = vmatpush1.msra.mxu0 %v754
        %787 = vmatprep.subr.mxu0 0.0
        %788 = vmatpush1.msra.mxu0 %v755
        %789 = vmatprep.subr.mxu0 0.0
        %790 = vmatpush1.msra.mxu0 %v756
        %791 = vmatprep.subr.mxu0 0.0
        %792 = vmatpush1.msra.mxu0 %v757
        %793 = vmatprep.subr.mxu0 0.0
        %794 = vmatpush1.msra.mxu0 %v758
        %795 = vmatprep.subr.mxu0 0.0
        %796 = vmatpush1.msra.mxu0 %v759
        %797 = vmatprep.subr.mxu0 0.0
        %798 = vmatpush1.msra.mxu0 0.0
        %799 = vmatprep.subr.mxu0 0.0
        %800 = vmatpush1.msra.mxu0 0.0
        %801 = vmatprep.subr.mxu0 0.0
        %802 = vmatpush1.msra.mxu0 0.0
        %803 = vmatprep.subr.mxu0 0.0
        %804 = vmatpush1.msra.mxu0 0.0
        %805 = vmatprep.subr.mxu0 0.0
        %806 = vmatpush1.msra.mxu0 0.0
        %807 = vmatprep.subr.mxu0 0.0
        %808 = vmatpush1.msra.mxu0 0.0
        %809 = vmatprep.subr.mxu0 0.0
        %810 = vmatpush1.msra.mxu0 0.0
        %811 = vmatprep.subr.mxu0 0.0
        %812 = vmatpush1.msra.mxu0 0.0
        %813 = vmatprep.subr.mxu0 0.0
        %814 = vmatpush1.msra.mxu0 0.0
        %815 = vmatprep.subr.mxu0 0.0
        %816 = vmatpush1.msra.mxu0 0.0
        %817 = vmatprep.subr.mxu0 0.0
        %818 = vmatpush1.msra.mxu0 0.0
        %819 = vmatprep.subr.mxu0 0.0
        %820 = vmatpush1.msra.mxu0 0.0
        %821 = vmatprep.subr.mxu0 0.0
        %822 = vmatpush1.msra.mxu0 0.0
        %823 = vmatprep.subr.mxu0 0.0
        %824 = vmatpush1.msra.mxu0 0.0
        %825 = vmatprep.subr.mxu0 0.0
        %826 = vmatpush1.msra.mxu0 0.0
        %827 = vmatprep.subr.mxu0 0.0
        %828 = vmatpush1.msra.mxu0 0.0
        %829 = vmatprep.mubr.f32.mxu0 0.0
        %830 = vmatmul.mubr.f32.gmra.mrb[0].mxu0 %v728
        %v831 = vpop.f32.mrb[0].mxu0
        %v832 = vadd.f32 %v764, %v831
        %v833 = vpop.f32.mrb[0].mxu0
        %834 = vmatprep.mubr.f32.mxu0 0.0
        %835 = vmatmul.mubr.f32.gmra.mrb[0].mxu0 %v729
        %v836 = vpop.f32.mrb[0].mxu0
        %v837 = vadd.f32 %v764, %v836
        %v838 = vpop.f32.mrb[0].mxu0
        %839 = vmatprep.mubr.f32.mxu0 0.0
        %840 = vmatmul.mubr.f32.gmra.mrb[0].mxu0 %v730
        %v841 = vpop.f32.mrb[0].mxu0
        %v842 = vadd.f32 %v764, %v841
        %v843 = vpop.f32.mrb[0].mxu0
        %844 = vmatprep.mubr.f32.mxu0 0.0
        %845 = vmatmul.mubr.f32.gmra.mrb[0].mxu0 %v731
        %v846 = vpop.f32.mrb[0].mxu0
        %v847 = vadd.f32 %v764, %v846
        %v848 = vpop.f32.mrb[0].mxu0
        %849 = vmatprep.mubr.f32.mxu0 0.0
        %850 = vmatmul.mubr.f32.gmra.mrb[0].mxu0 %v732
        %v851 = vpop.f32.mrb[0].mxu0
        %v852 = vadd.f32 %v764, %v851
        %v853 = vpop.f32.mrb[0].mxu0
        %854 = vmatprep.mubr.f32.mxu0 0.0
        %855 = vmatmul.mubr.f32.gmra.mrb[0].mxu0 %v733
        %v856 = vpop.f32.mrb[0].mxu0
        %v857 = vadd.f32 %v764, %v856
        %v858 = vpop.f32.mrb[0].mxu0
        %859 = vmatprep.mubr.f32.mxu0 0.0
        %860 = vmatmul.mubr.f32.gmra.mrb[0].mxu0 %v734
        %v861 = vpop.f32.mrb[0].mxu0
        %v862 = vadd.f32 %v764, %v861
        %v863 = vpop.f32.mrb[0].mxu0
        %864 = vmatprep.mubr.f32.mxu0 0.0
        %865 = vmatmul.mubr.f32.gmra.mrb[0].mxu0 %v735
        %v866 = vpop.f32.mrb[0].mxu0
        %v867 = vadd.f32 %v764, %v866
        %v868 = vpop.f32.mrb[0].mxu0
        %869 = vmatprep.mubr.f32.mxu0 0.0
        %870 = vmatmul.mubr.f32.gmra.mrb[0].mxu0 %v736
        %v871 = vpop.f32.mrb[0].mxu0
        %v872 = vadd.f32 %v764, %v871
        %v873 = vpop.f32.mrb[0].mxu0
        %874 = vmatprep.mubr.f32.mxu0 0.0
        %875 = vmatmul.mubr.f32.gmra.mrb[0].mxu0 %v737
        %v876 = vpop.f32.mrb[0].mxu0
        %v877 = vadd.f32 %v764, %v876
        %v878 = vpop.f32.mrb[0].mxu0
        %879 = vmatprep.mubr.f32.mxu0 0.0
        %880 = vmatmul.mubr.f32.gmra.mrb[0].mxu0 %v738
        %v881 = vpop.f32.mrb[0].mxu0
        %v882 = vadd.f32 %v764, %v881
        %v883 = vpop.f32.mrb[0].mxu0
        %884 = vmatprep.mubr.f32.mxu0 0.0
        %885 = vmatmul.mubr.f32.gmra.mrb[0].mxu0 %v739
        %v886 = vpop.f32.mrb[0].mxu0
        %v887 = vadd.f32 %v764, %v886
        %v888 = vpop.f32.mrb[0].mxu0
        %889 = vmatprep.mubr.f32.mxu0 0.0
        %890 = vmatmul.mubr.f32.gmra.mrb[0].mxu0 %v740
        %v891 = vpop.f32.mrb[0].mxu0
        %v892 = vadd.f32 %v764, %v891
        %v893 = vpop.f32.mrb[0].mxu0
        %894 = vmatprep.mubr.f32.mxu0 0.0
        %895 = vmatmul.mubr.f32.gmra.mrb[0].mxu0 %v741
        %v896 = vpop.f32.mrb[0].mxu0
        %v897 = vadd.f32 %v764, %v896
        %v898 = vpop.f32.mrb[0].mxu0
        %899 = vmatprep.mubr.f32.mxu0 0.0
        %900 = vmatmul.mubr.f32.gmra.mrb[0].mxu0 %v742
        %v901 = vpop.f32.mrb[0].mxu0
        %v902 = vadd.f32 %v764, %v901
        %v903 = vpop.f32.mrb[0].mxu0
        %904 = vmatprep.mubr.f32.mxu0 0.0
        %905 = vmatmul.mubr.f32.gmra.mrb[0].mxu0 %v743
        %v906 = vpop.f32.mrb[0].mxu0
        %v907 = vadd.f32 %v764, %v906
        %v908 = vpop.f32.mrb[0].mxu0
        %909 = vdwg.mxu0
        %v910 = vlaneseq
        %v911 = vand.u32 %v910, 127
        %vm912 = vcmp.lt.s32.totalorder %v911, 64
        %v913 = vmax.f32 %v832, 0.0
        %v914 = vmax.f32 %v837, 0.0
        %v915 = vmax.f32 %v842, 0.0
        %v916 = vmax.f32 %v847, 0.0
        %v917 = vmax.f32 %v852, 0.0
        %v918 = vmax.f32 %v857, 0.0
        %v919 = vmax.f32 %v862, 0.0
        %v920 = vmax.f32 %v867, 0.0
        %v921 = vmax.f32 %v872, 0.0
        %v922 = vmax.f32 %v877, 0.0
        %v923 = vmax.f32 %v882, 0.0
        %v924 = vmax.f32 %v887, 0.0
        %v925 = vmax.f32 %v892, 0.0
        %v926 = vmax.f32 %v897, 0.0
        %v927 = vmax.f32 %v902, 0.0
        %v928 = vmax.f32 %v907, 0.0
        %v929 = vsel %vm912, %v913, %v832
        %v930 = vsel %vm912, %v914, %v837
        %v931 = vsel %vm912, %v915, %v842
        %v932 = vsel %vm912, %v916, %v847
        %v933 = vsel %vm912, %v917, %v852
        %v934 = vsel %vm912, %v918, %v857
        %v935 = vsel %vm912, %v919, %v862
        %v936 = vsel %vm912, %v920, %v867
        %v937 = vsel %vm912, %v921, %v872
        %v938 = vsel %vm912, %v922, %v877
        %v939 = vsel %vm912, %v923, %v882
        %v940 = vsel %vm912, %v924, %v887
        %v941 = vsel %vm912, %v925, %v892
        %v942 = vsel %vm912, %v926, %v897
        %v943 = vsel %vm912, %v927, %v902
        %v944 = vsel %vm912, %v928, %v907
        %v945 = vld [vmem:[#allocation3 + $0x108] sm:$0xff]
        %v946 = vld [vmem:[#allocation3 + $0x110] sm:$0xff]
        %v947 = vld [vmem:[#allocation3 + $0x118] sm:$0xff]
        %v948 = vld [vmem:[#allocation3 + $0x120] sm:$0xff]
        %v949 = vld [vmem:[#allocation3 + $0x128] sm:$0xff]
        %v950 = vld [vmem:[#allocation3 + $0x130] sm:$0xff]
        %v951 = vld [vmem:[#allocation3 + $0x138] sm:$0xff]
        %v952 = vld [vmem:[#allocation3 + $0x140] sm:$0xff]
        %v953 = vld [vmem:[#allocation3 + $0x148] sm:$0xff]
        %v954 = vld [vmem:[#allocation3 + $0x150] sm:$0xff]
        %v955 = vld [vmem:[#allocation3 + $0x158] sm:$0xff]
        %v956 = vld [vmem:[#allocation3 + $0x160] sm:$0xff]
        %v957 = vld [vmem:[#allocation3 + $0x168] sm:$0xff]
        %v958 = vld [vmem:[#allocation3 + $0x170] sm:$0xff]
        %v959 = vld [vmem:[#allocation3 + $0x178] sm:$0xff]
        %v960 = vld [vmem:[#allocation3 + $0x180] sm:$0xff]
        %v961 = vld [vmem:[%s3 + $0x3] sm:$0x1]
        %v962 = vlaneseq
        %v963 = vshrl.u32 %v962, 7
        %v964 = vsub.s32 0, %v963
        %v965 = vrot.slane %v961, %v964
        %966 = vmatprep.subr.mxu0 0.0
        %967 = vmatpush1.msra.mxu0 %v945
        %968 = vmatprep.subr.mxu0 0.0
        %969 = vmatpush1.msra.mxu0 %v946
        %970 = vmatprep.subr.mxu0 0.0
        %971 = vmatpush1.msra.mxu0 %v947
        %972 = vmatprep.subr.mxu0 0.0
        %973 = vmatpush1.msra.mxu0 %v948
        %974 = vmatprep.subr.mxu0 0.0
        %975 = vmatpush1.msra.mxu0 %v949
        %976 = vmatprep.subr.mxu0 0.0
        %977 = vmatpush1.msra.mxu0 %v950
        %978 = vmatprep.subr.mxu0 0.0
        %979 = vmatpush1.msra.mxu0 %v951
        %980 = vmatprep.subr.mxu0 0.0
        %981 = vmatpush1.msra.mxu0 %v952
        %982 = vmatprep.subr.mxu0 0.0
        %983 = vmatpush1.msra.mxu0 %v953
        %984 = vmatprep.subr.mxu0 0.0
        %985 = vmatpush1.msra.mxu0 %v954
        %986 = vmatprep.subr.mxu0 0.0
        %987 = vmatpush1.msra.mxu0 %v955
        %988 = vmatprep.subr.mxu0 0.0
        %989 = vmatpush1.msra.mxu0 %v956
        %990 = vmatprep.subr.mxu0 0.0
        %991 = vmatpush1.msra.mxu0 %v957
        %992 = vmatprep.subr.mxu0 0.0
        %993 = vmatpush1.msra.mxu0 %v958
        %994 = vmatprep.subr.mxu0 0.0
        %995 = vmatpush1.msra.mxu0 %v959
        %996 = vmatprep.subr.mxu0 0.0
        %997 = vmatpush1.msra.mxu0 %v960
        %998 = vmatprep.subr.mxu0 0.0
        %999 = vmatpush1.msra.mxu0 0.0
        %1000 = vmatprep.subr.mxu0 0.0
        %1001 = vmatpush1.msra.mxu0 0.0
        %1002 = vmatprep.subr.mxu0 0.0
        %1003 = vmatpush1.msra.mxu0 0.0
        %1004 = vmatprep.subr.mxu0 0.0
        %1005 = vmatpush1.msra.mxu0 0.0
        %1006 = vmatprep.subr.mxu0 0.0
        %1007 = vmatpush1.msra.mxu0 0.0
        %1008 = vmatprep.subr.mxu0 0.0
        %1009 = vmatpush1.msra.mxu0 0.0
        %1010 = vmatprep.subr.mxu0 0.0
        %1011 = vmatpush1.msra.mxu0 0.0
        %1012 = vmatprep.subr.mxu0 0.0
        %1013 = vmatpush1.msra.mxu0 0.0
        %1014 = vmatprep.subr.mxu0 0.0
        %1015 = vmatpush1.msra.mxu0 0.0
        %1016 = vmatprep.subr.mxu0 0.0
        %1017 = vmatpush1.msra.mxu0 0.0
        %1018 = vmatprep.subr.mxu0 0.0
        %1019 = vmatpush1.msra.mxu0 0.0
        %1020 = vmatprep.subr.mxu0 0.0
        %1021 = vmatpush1.msra.mxu0 0.0
        %1022 = vmatprep.subr.mxu0 0.0
        %1023 = vmatpush1.msra.mxu0 0.0
        %1024 = vmatprep.subr.mxu0 0.0
        %1025 = vmatpush1.msra.mxu0 0.0
        %1026 = vmatprep.subr.mxu0 0.0
        %1027 = vmatpush1.msra.mxu0 0.0
        %1028 = vmatprep.subr.mxu0 0.0
        %1029 = vmatpush1.msra.mxu0 0.0
        %1030 = vmatprep.mubr.f32.mxu0 0.0
        %1031 = vmatmul.mubr.f32.gmra.mrb[0].mxu0 %v929
        %v1032 = vpop.f32.mrb[0].mxu0
        %v1033 = vadd.f32 %v965, %v1032
        %v1034 = vpop.f32.mrb[0].mxu0
        %1035 = vmatprep.mubr.f32.mxu0 0.0
        %1036 = vmatmul.mubr.f32.gmra.mrb[0].mxu0 %v930
        %v1037 = vpop.f32.mrb[0].mxu0
        %v1038 = vadd.f32 %v965, %v1037
        %v1039 = vpop.f32.mrb[0].mxu0
        %1040 = vmatprep.mubr.f32.mxu0 0.0
        %1041 = vmatmul.mubr.f32.gmra.mrb[0].mxu0 %v931
        %v1042 = vpop.f32.mrb[0].mxu0
        %v1043 = vadd.f32 %v965, %v1042
        %v1044 = vpop.f32.mrb[0].mxu0
        %1045 = vmatprep.mubr.f32.mxu0 0.0
        %1046 = vmatmul.mubr.f32.gmra.mrb[0].mxu0 %v932
        %v1047 = vpop.f32.mrb[0].mxu0
        %v1048 = vadd.f32 %v965, %v1047
        %v1049 = vpop.f32.mrb[0].mxu0
        %1050 = vmatprep.mubr.f32.mxu0 0.0
        %1051 = vmatmul.mubr.f32.gmra.mrb[0].mxu0 %v933
        %v1052 = vpop.f32.mrb[0].mxu0
        %v1053 = vadd.f32 %v965, %v1052
        %v1054 = vpop.f32.mrb[0].mxu0
        %1055 = vmatprep.mubr.f32.mxu0 0.0
        %1056 = vmatmul.mubr.f32.gmra.mrb[0].mxu0 %v934
        %v1057 = vpop.f32.mrb[0].mxu0
        %v1058 = vadd.f32 %v965, %v1057
        %v1059 = vpop.f32.mrb[0].mxu0
        %1060 = vmatprep.mubr.f32.mxu0 0.0
        %1061 = vmatmul.mubr.f32.gmra.mrb[0].mxu0 %v935
        %v1062 = vpop.f32.mrb[0].mxu0
        %v1063 = vadd.f32 %v965, %v1062
        %v1064 = vpop.f32.mrb[0].mxu0
        %1065 = vmatprep.mubr.f32.mxu0 0.0
        %1066 = vmatmul.mubr.f32.gmra.mrb[0].mxu0 %v936
        %v1067 = vpop.f32.mrb[0].mxu0
        %v1068 = vadd.f32 %v965, %v1067
        %v1069 = vpop.f32.mrb[0].mxu0
        %1070 = vmatprep.mubr.f32.mxu0 0.0
        %1071 = vmatmul.mubr.f32.gmra.mrb[0].mxu0 %v937
        %v1072 = vpop.f32.mrb[0].mxu0
        %v1073 = vadd.f32 %v965, %v1072
        %v1074 = vpop.f32.mrb[0].mxu0
        %1075 = vmatprep.mubr.f32.mxu0 0.0
        %1076 = vmatmul.mubr.f32.gmra.mrb[0].mxu0 %v938
        %v1077 = vpop.f32.mrb[0].mxu0
        %v1078 = vadd.f32 %v965, %v1077
        %v1079 = vpop.f32.mrb[0].mxu0
        %1080 = vmatprep.mubr.f32.mxu0 0.0
        %1081 = vmatmul.mubr.f32.gmra.mrb[0].mxu0 %v939
        %v1082 = vpop.f32.mrb[0].mxu0
        %v1083 = vadd.f32 %v965, %v1082
        %v1084 = vpop.f32.mrb[0].mxu0
        %1085 = vmatprep.mubr.f32.mxu0 0.0
        %1086 = vmatmul.mubr.f32.gmra.mrb[0].mxu0 %v940
        %v1087 = vpop.f32.mrb[0].mxu0
        %v1088 = vadd.f32 %v965, %v1087
        %v1089 = vpop.f32.mrb[0].mxu0
        %1090 = vmatprep.mubr.f32.mxu0 0.0
        %1091 = vmatmul.mubr.f32.gmra.mrb[0].mxu0 %v941
        %v1092 = vpop.f32.mrb[0].mxu0
        %v1093 = vadd.f32 %v965, %v1092
        %v1094 = vpop.f32.mrb[0].mxu0
        %1095 = vmatprep.mubr.f32.mxu0 0.0
        %1096 = vmatmul.mubr.f32.gmra.mrb[0].mxu0 %v942
        %v1097 = vpop.f32.mrb[0].mxu0
        %v1098 = vadd.f32 %v965, %v1097
        %v1099 = vpop.f32.mrb[0].mxu0
        %1100 = vmatprep.mubr.f32.mxu0 0.0
        %1101 = vmatmul.mubr.f32.gmra.mrb[0].mxu0 %v943
        %v1102 = vpop.f32.mrb[0].mxu0
        %v1103 = vadd.f32 %v965, %v1102
        %v1104 = vpop.f32.mrb[0].mxu0
        %1105 = vmatprep.mubr.f32.mxu0 0.0
        %1106 = vmatmul.mubr.f32.gmra.mrb[0].mxu0 %v944
        %v1107 = vpop.f32.mrb[0].mxu0
        %v1108 = vadd.f32 %v965, %v1107
        %v1109 = vpop.f32.mrb[0].mxu0
        %1110 = vdwg.mxu0
        %vm1111 = vcmask 72704
        %1112 = vst.msk [vmem:[%s301] sm:$0xff] %vm1111, %v1033
        %1113 = vst.msk [vmem:[%s301 + $0x8] sm:$0xff] %vm1111, %v1038
        %1114 = vst.msk [vmem:[%s301 + $0x10] sm:$0xff] %vm1111, %v1043
        %1115 = vst.msk [vmem:[%s301 + $0x18] sm:$0xff] %vm1111, %v1048
        %1116 = vst.msk [vmem:[%s301 + $0x20] sm:$0xff] %vm1111, %v1053
        %1117 = vst.msk [vmem:[%s301 + $0x28] sm:$0xff] %vm1111, %v1058
        %1118 = vst.msk [vmem:[%s301 + $0x30] sm:$0xff] %vm1111, %v1063
        %1119 = vst.msk [vmem:[%s301 + $0x38] sm:$0xff] %vm1111, %v1068
        %1120 = vst.msk [vmem:[%s301 + $0x40] sm:$0xff] %vm1111, %v1073
        %1121 = vst.msk [vmem:[%s301 + $0x48] sm:$0xff] %vm1111, %v1078
        %1122 = vst.msk [vmem:[%s301 + $0x50] sm:$0xff] %vm1111, %v1083
        %1123 = vst.msk [vmem:[%s301 + $0x58] sm:$0xff] %vm1111, %v1088
        %1124 = vst.msk [vmem:[%s301 + $0x60] sm:$0xff] %vm1111, %v1093
        %1125 = vst.msk [vmem:[%s301 + $0x68] sm:$0xff] %vm1111, %v1098
        %1126 = vst.msk [vmem:[%s301 + $0x70] sm:$0xff] %vm1111, %v1103
        %1127 = vst.msk [vmem:[%s301 + $0x78] sm:$0xff] %vm1111, %v1108
        %p1128 = scmp.eq.s32.totalorder %s26, 0
        // Predicated region
        $region41: #{tpu_custom_call.1} parent=35 // pred_check
          %p1129 = pneg %p1128
        $region42: #{tpu_custom_call.1} parent=35 // pred_check_branch
          %1131 = sbr.rel (%p1129) target = $region44
        $region43: #{tpu_custom_call.1} parent=35 // pred_region
          %1132 = vst [vmem:[#allocation2] sm:$0x1] -inf
        $region44: #{tpu_custom_call.1} parent=35 // pred_fallthru
          _
        %v1133 = vld [vmem:[#allocation2] sm:$0x1]
        %v1134 = vmax.f32 %v728, %v732
        %v1135 = vmax.f32 %v729, %v733
        %v1136 = vmax.f32 %v730, %v734
        %v1137 = vmax.f32 %v731, %v735
        %v1138 = vmax.f32 %v1134, %v736
        %v1139 = vmax.f32 %v1135, %v737
        %v1140 = vmax.f32 %v1136, %v738
        %v1141 = vmax.f32 %v1137, %v739
        %v1142 = vmax.f32 %v1138, %v740
        %v1143 = vmax.f32 %v1139, %v741
        %v1144 = vmax.f32 %v1140, %v742
        %v1145 = vmax.f32 %v1141, %v743
        %v1146 = vmax.f32 %v1142, %v1143
        %v1147 = vmax.f32 %v1144, %v1145
        %v1148 = vmax.f32 %v1146, %v1147
        %v1149 = vrot.slane %v1148, 4
        %v1150 = vmax.f32 %v1148, %v1149
        %v1151 = vrot.slane %v1150, 2
        %v1152 = vmax.f32 %v1150, %v1151
        %v1153 = vrot.slane %v1152, 1
        %v1154 = vmax.f32 %v1152, %v1153
        %v1155 = vmax.f32 %v1133, %v1154
        %1156 = vst [vmem:[#allocation2] sm:$0x1] %v1155
        %p1157 = scmp.eq.s32.totalorder %s26, 1
        // Predicated region
        $region45: #{tpu_custom_call.1} parent=35 // pred_check
          %p1158 = pneg %p1157
        $region46: #{tpu_custom_call.1} parent=35 // pred_check_branch
          %1160 = sbr.rel (%p1158) target = $region48
        $region47: #{tpu_custom_call.1} parent=35 // pred_region
          %v1161 = vld [vmem:[#allocation2] sm:$0x1]
          %v1162 = vld [vmem:[#allocation3 + $0x188] sm:$0xff]
          %v1163 = vld [vmem:[#allocation3 + $0x190] sm:$0xff]
          %v1164 = vld [vmem:[#allocation3 + $0x198] sm:$0xff]
          %v1165 = vld [vmem:[#allocation3 + $0x1a0] sm:$0xff]
          %v1166 = vld [vmem:[#allocation3 + $0x1a8] sm:$0xff]
          %v1167 = vld [vmem:[#allocation3 + $0x1b0] sm:$0xff]
          %v1168 = vld [vmem:[#allocation3 + $0x1b8] sm:$0xff]
          %v1169 = vld [vmem:[#allocation3 + $0x1c0] sm:$0xff]
          %v1170 = vld [vmem:[#allocation3 + $0x1c8] sm:$0xff]
          %v1171 = vld [vmem:[#allocation3 + $0x1d0] sm:$0xff]
          %v1172 = vld [vmem:[#allocation3 + $0x1d8] sm:$0xff]
          %v1173 = vld [vmem:[#allocation3 + $0x1e0] sm:$0xff]
          %v1174 = vld [vmem:[#allocation3 + $0x1e8] sm:$0xff]
          %v1175 = vld [vmem:[#allocation3 + $0x1f0] sm:$0xff]
          %v1176 = vld [vmem:[#allocation3 + $0x1f8] sm:$0xff]
          %v1177 = vld [vmem:[#allocation3 + $0x200] sm:$0xff]
          %v1178 = vld [vmem:[%s3 + $0x4] sm:$0x1]
          %1179 = vmatprep.subr.mxu0 0.0
          %1180 = vmatpush1.msra.mxu0 %v1162
          %1181 = vmatprep.subr.mxu0 0.0
          %1182 = vmatpush1.msra.mxu0 %v1163
          %1183 = vmatprep.subr.mxu0 0.0
          %1184 = vmatpush1.msra.mxu0 %v1164
          %1185 = vmatprep.subr.mxu0 0.0
          %1186 = vmatpush1.msra.mxu0 %v1165
          %1187 = vmatprep.subr.mxu0 0.0
          %1188 = vmatpush1.msra.mxu0 %v1166
          %1189 = vmatprep.subr.mxu0 0.0
          %1190 = vmatpush1.msra.mxu0 %v1167
          %1191 = vmatprep.subr.mxu0 0.0
          %1192 = vmatpush1.msra.mxu0 %v1168
          %1193 = vmatprep.subr.mxu0 0.0
          %1194 = vmatpush1.msra.mxu0 %v1169
          %1195 = vmatprep.subr.mxu0 0.0
          %1196 = vmatpush1.msra.mxu0 %v1170
          %1197 = vmatprep.subr.mxu0 0.0
          %1198 = vmatpush1.msra.mxu0 %v1171
          %1199 = vmatprep.subr.mxu0 0.0
          %1200 = vmatpush1.msra.mxu0 %v1172
          %1201 = vmatprep.subr.mxu0 0.0
          %1202 = vmatpush1.msra.mxu0 %v1173
          %1203 = vmatprep.subr.mxu0 0.0
          %1204 = vmatpush1.msra.mxu0 %v1174
          %1205 = vmatprep.subr.mxu0 0.0
          %1206 = vmatpush1.msra.mxu0 %v1175
          %1207 = vmatprep.subr.mxu0 0.0
          %1208 = vmatpush1.msra.mxu0 %v1176
          %1209 = vmatprep.subr.mxu0 0.0
          %1210 = vmatpush1.msra.mxu0 %v1177
          %1211 = vmatprep.subr.mxu0 0.0
          %1212 = vmatpush1.msra.mxu0 0.0
          %1213 = vmatprep.subr.mxu0 0.0
          %1214 = vmatpush1.msra.mxu0 0.0
          %1215 = vmatprep.subr.mxu0 0.0
          %1216 = vmatpush1.msra.mxu0 0.0
          %1217 = vmatprep.subr.mxu0 0.0
          %1218 = vmatpush1.msra.mxu0 0.0
          %1219 = vmatprep.subr.mxu0 0.0
          %1220 = vmatpush1.msra.mxu0 0.0
          %1221 = vmatprep.subr.mxu0 0.0
          %1222 = vmatpush1.msra.mxu0 0.0
          %1223 = vmatprep.subr.mxu0 0.0
          %1224 = vmatpush1.msra.mxu0 0.0
          %1225 = vmatprep.subr.mxu0 0.0
          %1226 = vmatpush1.msra.mxu0 0.0
          %1227 = vmatprep.subr.mxu0 0.0
          %1228 = vmatpush1.msra.mxu0 0.0
          %1229 = vmatprep.subr.mxu0 0.0
          %1230 = vmatpush1.msra.mxu0 0.0
          %1231 = vmatprep.subr.mxu0 0.0
          %1232 = vmatpush1.msra.mxu0 0.0
          %1233 = vmatprep.subr.mxu0 0.0
          %1234 = vmatpush1.msra.mxu0 0.0
          %1235 = vmatprep.subr.mxu0 0.0
          %1236 = vmatpush1.msra.mxu0 0.0
          %1237 = vmatprep.subr.mxu0 0.0
          %1238 = vmatpush1.msra.mxu0 0.0
          %1239 = vmatprep.subr.mxu0 0.0
          %1240 = vmatpush1.msra.mxu0 0.0
          %1241 = vmatprep.subr.mxu0 0.0
          %1242 = vmatpush1.msra.mxu0 0.0
          %1243 = vmatprep.mubr.f32.mxu0 0.0
          %1244 = vmatmul.mubr.f32.gmra.mrb[0].mxu0 %v1161
          %v1245 = vpop.f32.mrb[0].mxu0
          %v1246 = vadd.f32 %v1178, %v1245
          %v1247 = vpop.f32.mrb[0].mxu0
          %1248 = vdwg.mxu0
          %v1249 = vmax.f32 %v1246, 0.0
          %v1250 = vld [vmem:[#allocation3 + $0x208] sm:$0xff]
          %v1251 = vld [vmem:[#allocation3 + $0x210] sm:$0xff]
          %v1252 = vld [vmem:[#allocation3 + $0x218] sm:$0xff]
          %v1253 = vld [vmem:[#allocation3 + $0x220] sm:$0xff]
          %v1254 = vld [vmem:[#allocation3 + $0x228] sm:$0xff]
          %v1255 = vld [vmem:[#allocation3 + $0x230] sm:$0xff]
          %v1256 = vld [vmem:[#allocation3 + $0x238] sm:$0xff]
          %v1257 = vld [vmem:[#allocation3 + $0x240] sm:$0xff]
          %v1258 = vld [vmem:[#allocation3 + $0x248] sm:$0xff]
          %v1259 = vld [vmem:[#allocation3 + $0x250] sm:$0xff]
          %v1260 = vld [vmem:[#allocation3 + $0x258] sm:$0xff]
          %v1261 = vld [vmem:[#allocation3 + $0x260] sm:$0xff]
          %v1262 = vld [vmem:[#allocation3 + $0x268] sm:$0xff]
          %v1263 = vld [vmem:[#allocation3 + $0x270] sm:$0xff]
          %v1264 = vld [vmem:[#allocation3 + $0x278] sm:$0xff]
          %v1265 = vld [vmem:[#allocation3 + $0x280] sm:$0xff]
          %v1266 = vld [vmem:[%s3 + $0x5] sm:$0x1]
          %1267 = vmatprep.subr.mxu0 0.0
          %1268 = vmatpush1.msra.mxu0 %v1250
          %1269 = vmatprep.subr.mxu0 0.0
          %1270 = vmatpush1.msra.mxu0 %v1251
          %1271 = vmatprep.subr.mxu0 0.0
          %1272 = vmatpush1.msra.mxu0 %v1252
          %1273 = vmatprep.subr.mxu0 0.0
          %1274 = vmatpush1.msra.mxu0 %v1253
          %1275 = vmatprep.subr.mxu0 0.0
          %1276 = vmatpush1.msra.mxu0 %v1254
          %1277 = vmatprep.subr.mxu0 0.0
          %1278 = vmatpush1.msra.mxu0 %v1255
          %1279 = vmatprep.subr.mxu0 0.0
          %1280 = vmatpush1.msra.mxu0 %v1256
          %1281 = vmatprep.subr.mxu0 0.0
          %1282 = vmatpush1.msra.mxu0 %v1257
          %1283 = vmatprep.subr.mxu0 0.0
          %1284 = vmatpush1.msra.mxu0 %v1258
          %1285 = vmatprep.subr.mxu0 0.0
          %1286 = vmatpush1.msra.mxu0 %v1259
          %1287 = vmatprep.subr.mxu0 0.0
          %1288 = vmatpush1.msra.mxu0 %v1260
          %1289 = vmatprep.subr.mxu0 0.0
          %1290 = vmatpush1.msra.mxu0 %v1261
          %1291 = vmatprep.subr.mxu0 0.0
          %1292 = vmatpush1.msra.mxu0 %v1262
          %1293 = vmatprep.subr.mxu0 0.0
          %1294 = vmatpush1.msra.mxu0 %v1263
          %1295 = vmatprep.subr.mxu0 0.0
          %1296 = vmatpush1.msra.mxu0 %v1264
          %1297 = vmatprep.subr.mxu0 0.0
          %1298 = vmatpush1.msra.mxu0 %v1265
          %1299 = vmatprep.subr.mxu0 0.0
          %1300 = vmatpush1.msra.mxu0 0.0
          %1301 = vmatprep.subr.mxu0 0.0
          %1302 = vmatpush1.msra.mxu0 0.0
          %1303 = vmatprep.subr.mxu0 0.0
          %1304 = vmatpush1.msra.mxu0 0.0
          %1305 = vmatprep.subr.mxu0 0.0
          %1306 = vmatpush1.msra.mxu0 0.0
          %1307 = vmatprep.subr.mxu0 0.0
          %1308 = vmatpush1.msra.mxu0 0.0
          %1309 = vmatprep.subr.mxu0 0.0
          %1310 = vmatpush1.msra.mxu0 0.0
          %1311 = vmatprep.subr.mxu0 0.0
          %1312 = vmatpush1.msra.mxu0 0.0
          %1313 = vmatprep.subr.mxu0 0.0
          %1314 = vmatpush1.msra.mxu0 0.0
          %1315 = vmatprep.subr.mxu0 0.0
          %1316 = vmatpush1.msra.mxu0 0.0
          %1317 = vmatprep.subr.mxu0 0.0
          %1318 = vmatpush1.msra.mxu0 0.0
          %1319 = vmatprep.subr.mxu0 0.0
          %1320 = vmatpush1.msra.mxu0 0.0
          %1321 = vmatprep.subr.mxu0 0.0
          %1322 = vmatpush1.msra.mxu0 0.0
          %1323 = vmatprep.subr.mxu0 0.0
          %1324 = vmatpush1.msra.mxu0 0.0
          %1325 = vmatprep.subr.mxu0 0.0
          %1326 = vmatpush1.msra.mxu0 0.0
          %1327 = vmatprep.subr.mxu0 0.0
          %1328 = vmatpush1.msra.mxu0 0.0
          %1329 = vmatprep.subr.mxu0 0.0
          %1330 = vmatpush1.msra.mxu0 0.0
          %1331 = vmatprep.mubr.f32.mxu0 0.0
          %1332 = vmatmul.mubr.f32.gmra.mrb[0].mxu0 %v1249
          %v1333 = vpop.f32.mrb[0].mxu0
          %v1334 = vadd.f32 %v1266, %v1333
          %v1335 = vpop.f32.mrb[0].mxu0
          %1336 = vdwg.mxu0
          %v1337 = vadd.f32 %v1334, %v319
          %vm1338 = vcmask 16384
          %1339 = vst.msk [vmem:[%s279] sm:$0x1] %vm1338, %v1337
        $region48: #{tpu_custom_call.1} parent=35 // pred_fallthru
          _
        %s1340 = smul.u32 16, %s26
        %p1341 = scmp.lt.s32.totalorder %s25, 1
        %s1342 = scalar_select %p1341, %s25, 1
        %p1343 = scmp.lt.s32.totalorder %s1340, 31
        %s1344 = scalar_select %p1343, %s1340, 31
        %s1345 = smul.addr %s1342, 32
        %s1346 = sadd.s32 %s1344, %s1345
        %s1347 = smul.addr %s1346, 8
        %s1348 = scalar_lea.vmem %s4, %s1347
        %s1349 = sand.u32 %s165, 1
        %s1350 = scalar_lea.sflag [#allocation5], %s1349
        %s1351 = sand.u32 %s165, 1
        %s1352 = scalar_lea.vmem [#allocation6], %s1351
        // Predicated region
        $region49: #{tpu_custom_call.1} parent=35 // pred_check
          %p1353 = pneg %p149
        $region50: #{tpu_custom_call.1} parent=35 // pred_check_branch
          %1355 = sbr.rel (%p1353) target = $region52
        $region51: #{tpu_custom_call.1} parent=35 // pred_region
          %s1356 = smul.u32 16, %s26
        $region52: #{tpu_custom_call.1} parent=35 // pred_fallthru
          _
        // Predicated region
        $region53: #{tpu_custom_call.1} parent=35 // pred_check
          %p1357 = pneg %p175
        $region54: #{tpu_custom_call.1} parent=35 // pred_check_branch
          %1359 = sbr.rel (%p1357) target = $region56
        $region55: #{tpu_custom_call.1} parent=35 // pred_region
          %s1361 = ssub.s32 16, 16
          %1362 = vsyncadd %s1350, %s1361
          %s1363 = smul.addr %s25, 16
          %s1364 = scalar_lea.hbm %s5, %s1363
          %s1366 = sshll.u32 %s1352, 4
          %s1367 = int_to_ptr.vmem [resolvable:$true] %s1366
          %1369 = dma.vmem_to_hbm [thread:$0]  %s1367, 16, %s1364, %s1350
        $region56: #{tpu_custom_call.1} parent=35 // pred_fallthru
          _
      $region36: #{tpu_custom_call.1} parent=5 // pred_fallthru
        _
      %p1370 = scmp.le.s32.totalorder 2, %s16
      // Predicated region
      $region57: #{tpu_custom_call.1} parent=5 // pred_check
        %p1371 = pneg %p1370
      $region58: #{tpu_custom_call.1} parent=5 // pred_check_branch
        %1373 = sbr.rel (%p1371) target = $region60
      $region59: #{tpu_custom_call.1} parent=5 // pred_region
        %s1374 = ssub.s32 %s16, 2
        // Predicated region
        $region61: #{tpu_custom_call.1} parent=59 // pred_check
          %p1375 = pneg %p155
        $region62: #{tpu_custom_call.1} parent=59 // pred_check_branch
          %1377 = sbr.rel (%p1375) target = $region64
        $region63: #{tpu_custom_call.1} parent=59 // pred_region
          %s1378 = smul.u32 16, %s28
          %p1379 = scmp.lt.s32.totalorder %s27, 1
          %s1380 = scalar_select %p1379, %s27, 1
          %p1381 = scmp.lt.s32.totalorder %s1378, 31
          %s1382 = scalar_select %p1381, %s1378, 31
          %s1383 = smul.addr %s1380, 32
          %s1384 = sadd.s32 %s1382, %s1383
          %s1385 = smul.addr %s1384, 8
          %s1386 = scalar_lea.vmem %s4, %s1385
        $region64: #{tpu_custom_call.1} parent=59 // pred_fallthru
          _
        // Predicated region
        $region65: #{tpu_custom_call.1} parent=59 // pred_check
          %p1387 = pneg %p181
        $region66: #{tpu_custom_call.1} parent=59 // pred_check_branch
          %1389 = sbr.rel (%p1387) target = $region68
        $region67: #{tpu_custom_call.1} parent=59 // pred_region
          %s1390 = sand.u32 %s166, 1
          %s1391 = scalar_lea.sflag [#allocation5], %s1390
          %s1392 = sand.u32 %s166, 1
          %s1393 = scalar_lea.vmem [#allocation6], %s1392
          %1394 = dma.done %s1391, 16
        $region68: #{tpu_custom_call.1} parent=59 // pred_fallthru
          _
      $region60: #{tpu_custom_call.1} parent=5 // pred_fallthru
        _
    $region6: #{tpu_custom_call.1} parent=1 // loop_footer
      %s20 = sadd.s32 1, %s16
    $region7: #{tpu_custom_call.1} parent=1 // loop_footer_branch
      %15 = sbr.rel target = $region3
    $region8: #{tpu_custom_call.1} parent=1 // loop_exit
      _
    %1395 = vsyncpa [#allocation4], 1
    %s1396 = scalar_lea.sflag [#allocation4], 1
    %1397 = vsyncpa %s1396, 1
    %1398 = vsyncpa [#allocation5], 1
    %s1399 = scalar_lea.sflag [#allocation5], 1
    %1400 = vsyncpa %s1399, 1

</llo_original>
